<compile_context>
chip_gen: v6e
topology: v6e:2x2x1
jax: 0.10.0
libtpu: 0.0.40
codegen_flags: <defaults>
</compile_context>

<pallas_src>
import jax
import jax.numpy as jnp
from jax import lax
from jax.experimental import pallas as pl
from jax.experimental.pallas import tpu as pltpu

LN_EPS = 1e-5                  # torch.nn.LayerNorm default
MXU_DTYPE = jnp.bfloat16       # MXU operand dtype (f32 accumulation)
LANE = 128


def _round_up(x, m):
    return ((x + m - 1) // m) * m


# ----------------------------------------------------------------------------
# shared math (used by the kernel with Ref sub-views and by the jnp reference)
# ----------------------------------------------------------------------------
def _mm(x, w):
    # MXU matmul with f32 accumulation; activations cast to the weight dtype.
    return jnp.dot(x.astype(w.dtype), w, preferred_element_type=jnp.float32)


def _range_mask(width, lo, hi):
    iota = lax.broadcasted_iota(jnp.int32, (1, width), 1)
    return ((iota >= lo) & (iota < hi)).astype(jnp.float32)


def _masked_ln(x, gamma, beta, mask, count):
    inv = 1.0 / count
    mu = jnp.sum(x * mask, axis=-1, keepdims=True) * inv
    d = (x - mu) * mask
    var = jnp.sum(d * d, axis=-1, keepdims=True) * inv
    return (x - mu) * lax.rsqrt(var + LN_EPS) * gamma + beta


def _forward_math(obs, h0_get, msk, W, Bv, dims):
    """Full fused forward. W(name)/Bv(name) return weight / bias sub-views."""
    L, d_z, d_base, h, a, DP, HP, AP = dims

    mask_z_in = _range_mask(DP, 0, d_z)
    mask_b_in = _range_mask(DP, d_z, d_z + d_base)
    mask_h = _range_mask(HP, 0, h)
    mask_cat = _range_mask(2 * HP, 0, h) + _range_mask(2 * HP, HP, HP + h)

    # ---- fused input LayerNorms (z over lanes [0,d_z), base over lanes
    #      [d_z,d_z+d_base)) + fused block-diagonal first Linear ---------------
    in_g, in_b = Bv("in_g"), Bv("in_b")
    ln_z = _masked_ln(obs, in_g, in_b, mask_z_in, d_z)
    ln_b = _masked_ln(obs, in_g, in_b, mask_b_in, d_base)
    x1 = ln_z * mask_z_in + ln_b * mask_b_in
    y = jnp.maximum(_mm(x1, W("w1_bd")) + Bv("bb1_bd"), 0.0)      # (TB, 2*HP)

    # ---- base branch (lanes [0:HP)) -> GRU input ------------------------------
    yb = _masked_ln(y[:, 0:HP], Bv("b_g1"), Bv("b_bt1"), mask_h, h)
    yb = jnp.maximum(_mm(yb, W("b_w2")) + Bv("b_bb2"), 0.0)
    feat = _masked_ln(yb, Bv("b_g2"), Bv("b_bt2"), mask_h, h)

    # ---- z branch (lanes [HP:2HP)) --------------------------------------------
    yz = _masked_ln(y[:, HP:2 * HP], Bv("z_g1"), Bv("z_bt1"), mask_h, h)
    yz = jnp.maximum(_mm(yz, W("z_w2")) + Bv("z_bb2"), 0.0)
    zfeat = _masked_ln(yz, Bv("z_g2"), Bv("z_bt2"), mask_h, h)

    # ---- GRU step(s): packed (HP, 3*HP) gate weights, 2 matmuls per layer ----
    x = feat
    hnews = []
    for l in range(L):
        hprev = h0_get(l) * msk
        gi = _mm(x, W(f"gru_wih_{l}")) + Bv(f"gru_bih_{l}")        # (TB, 3*HP)
        gh = _mm(hprev, W(f"gru_whh_{l}")) + Bv(f"gru_bhh_{l}")    # (TB, 3*HP)
        r = jax.nn.sigmoid(gi[:, 0:HP] + gh[:, 0:HP])
        zg = jax.nn.sigmoid(gi[:, HP:2 * HP] + gh[:, HP:2 * HP])
        n = jnp.tanh(gi[:, 2 * HP:3 * HP] + r * gh[:, 2 * HP:3 * HP])
        hnew = (1.0 - zg) * n + zg * hprev
        hnews.append(hnew)
        x = hnew
    feat = _masked_ln(x, Bv("rnn_g"), Bv("rnn_b"), mask_h, h)

    # ---- base2 MLP on the lane-aligned concat [rnn_out | z_feat] -------------
    cat = jnp.concatenate([feat, zfeat], axis=-1)                  # (TB, 2*HP)
    cat = _masked_ln(cat, Bv("c_g0"), Bv("c_b0"), mask_cat, 2 * h)
    h2 = jnp.maximum(_mm(cat, W("c_w1")) + Bv("c_bb1"), 0.0)
    h2 = _masked_ln(h2, Bv("c_g1"), Bv("c_bt1"), mask_h, h)
    h2 = jnp.maximum(_mm(h2, W("c_w2")) + Bv("c_bb2"), 0.0)
    h2 = _masked_ln(h2, Bv("c_g2"), Bv("c_bt2"), mask_h, h)

    # ---- act head: deterministic (mode); logp(argmax) = max - logsumexp ------
    logits = _mm(h2, W("act_w")) + Bv("act_b")                     # (TB, AP)
    lane = lax.broadcasted_iota(jnp.int32, logits.shape, 1)
    logits = jnp.where(lane < a, logits, -1e30)                    # kill padded lanes
    m = jnp.max(logits, axis=-1, keepdims=True)
    lse = m + jnp.log(jnp.sum(jnp.exp(logits - m), axis=-1, keepdims=True))
    logp = m - lse
    idx = jnp.min(jnp.where(logits >= m, lane, AP),
                  axis=-1, keepdims=True)                          # first argmax
    return logits, idx, logp, hnews


# ----------------------------------------------------------------------------
# fused kernel (factory so static dims / packed-param offsets are baked in)
# ----------------------------------------------------------------------------
def _make_fused_kernel(dims, woff, boff):
    L, HP = dims[0], dims[6]

    def kernel(obs_ref, h0_ref, mask_ref, w_ref, b_ref, out_ref, hnew_ref):
        def W(name):
            o, r, c = woff[name]
            return w_ref[o:o + r, 0:c]

        def Bv(name):
            o, c = boff[name]
            return b_ref[o:o + 1, 0:c]

        _, idx, logp, hnews = _forward_math(
            obs_ref[...], lambda l: h0_ref[:, l * HP:(l + 1) * HP],
            mask_ref[...], W, Bv, dims)

        for l, hn in enumerate(hnews):
            hnew_ref[:, l * HP:(l + 1) * HP] = hn

        tb = idx.shape[0]
        out_lane = lax.broadcasted_iota(jnp.int32, (tb, LANE), 1)
        out_ref[...] = jnp.where(out_lane == 0, idx.astype(jnp.float32),
                                 jnp.where(out_lane == 1, logp, 0.0))

    return kernel


# ----------------------------------------------------------------------------
# forward wrapper: pack obs/hidden, pick batch tiles, one pallas_call
# ----------------------------------------------------------------------------
def r_actor_forward(w_slab, b_slab, meta, obs, rnn_states, masks):
    obs = obs.astype(jnp.float32)
    rnn_states = rnn_states.astype(jnp.float32)
    masks = masks.astype(jnp.float32)

    B = obs.shape[0]
    L, H, HP = meta["L"], meta["h"], meta["HP"]
    DP, AP = meta["DP"], meta["AP"]
    d_obs = meta["d_z"] + meta["d_base"]

    # Batch tiling: >= 2 grid steps for moderate batches (v7x has 2 TensorCores;
    # "parallel" only shards when the grid has >= 2 steps); 512-row tiles for
    # large batches to amortize the ~0.35us per-grid-step overhead.
    Bp = _round_up(max(B, 1), 8)
    if Bp <= 16:
        TB = Bp
    elif Bp <= 1024:
        TB = _round_up((Bp + 1) // 2, 8)
        Bp = _round_up(Bp, TB)
    else:
        TB = 512
        Bp = _round_up(Bp, TB)

    # Single packed obs slab: lanes [0,d_z)=z features, [d_z,d_obs)=base features.
    obs_p = jnp.zeros((Bp, DP), jnp.float32).at[:B, :d_obs].set(obs)
    h0 = jnp.zeros((Bp, L * HP), jnp.float32)
    for l in range(L):
        h0 = h0.at[:B, l * HP:l * HP + H].set(rnn_states[:, l, :])
    mk = jnp.zeros((Bp, 1), jnp.float32).at[:B].set(masks[:, :1])

    dims = (L, meta["d_z"], meta["d_base"], H, meta["a"], DP, HP, AP)
    kernel = _make_fused_kernel(dims, meta["woff"], meta["boff"])

    in_specs = [
        pl.BlockSpec((TB, DP), lambda i: (i, 0)),
        pl.BlockSpec((TB, L * HP), lambda i: (i, 0)),
        pl.BlockSpec((TB, 1), lambda i: (i, 0)),
        # Param slabs: constant block index -> fetched once by the pipeline.
        pl.BlockSpec(w_slab.shape, lambda i: (0, 0)),
        pl.BlockSpec(b_slab.shape, lambda i: (0, 0)),
    ]
    out_specs = (pl.BlockSpec((TB, LANE), lambda i: (i, 0)),
                 pl.BlockSpec((TB, L * HP), lambda i: (i, 0)))
    out_shape = (jax.ShapeDtypeStruct((Bp, LANE), jnp.float32),
                 jax.ShapeDtypeStruct((Bp, L * HP), jnp.float32))

    # advisory cost estimate for the XLA scheduler
    flops = 2 * Bp * (DP * 2 * HP + 2 * HP * HP        # fused first Linear + 2 second Linears
                      + L * 2 * HP * 3 * HP            # GRU (packed gates)
                      + 2 * HP * HP + HP * HP          # base2
                      + HP * AP)                       # act head
    transcendentals = Bp * (L * 3 * HP + AP + 16)
    bytes_accessed = (int(obs_p.size + h0.size + mk.size) * 4
                      + int(w_slab.size) * 2 + int(b_slab.size) * 4
                      + (Bp * LANE + Bp * L * HP) * 4)

    out_slab, hnew = pl.pallas_call(
        kernel,
        grid=(Bp // TB,),
        in_specs=in_specs,
        out_specs=out_specs,
        out_shape=out_shape,
        input_output_aliases={1: 1},      # hidden-state buffer reused for the new hidden
        compiler_params=pltpu.CompilerParams(
            dimension_semantics=("parallel",)),
        cost_estimate=pl.CostEstimate(flops=int(flops),
                                      transcendentals=int(transcendentals),
                                      bytes_accessed=int(bytes_accessed)),
    )(obs_p, h0, mk, w_slab, b_slab)

    actions = out_slab[:B, 0:1].astype(jnp.int32)
    action_log_probs = out_slab[:B, 1:2]
    rnn_states_new = hnew[:B].reshape(B, L, HP)[:, :, :H]
    return actions, action_log_probs, rnn_states_new


# ----------------------------------------------------------------------------
# pure-jnp reference (same packed params / same math, no Pallas) for checking
# ----------------------------------------------------------------------------
def r_actor_reference(w_slab, b_slab, meta, obs, rnn_states, masks):
    B = obs.shape[0]
    L, H, HP = meta["L"], meta["h"], meta["HP"]
    DP, AP = meta["DP"], meta["AP"]
    d_obs = meta["d_z"] + meta["d_base"]
    woff, boff = meta["woff"], meta["boff"]

    obs_p = jnp.zeros((B, DP), jnp.float32).at[:, :d_obs].set(obs.astype(jnp.float32))
    h0 = jnp.zeros((B, L * HP), jnp.float32)
    for l in range(L):
        h0 = h0.at[:, l * HP:l * HP + H].set(rnn_states[:, l, :].astype(jnp.float32))
    mk = masks[:, :1].astype(jnp.float32)

    def W(name):
        o, r, c = woff[name]
        return w_slab[o:o + r, :c]

    def Bv(name):
        o, c = boff[name]
        return b_slab[o:o + 1, :c]

    dims = (L, meta["d_z"], meta["d_base"], H, meta["a"], DP, HP, AP)
    logits, idx, logp, hnews = _forward_math(
        obs_p, lambda l: h0[:, l * HP:(l + 1) * HP], mk, W, Bv, dims)
    hnew = jnp.stack(hnews, axis=1)[:, :, :H]
    return logits, idx.astype(jnp.int32), logp, hnew


# ----------------------------------------------------------------------------
# deterministic parameter construction (synthetic; shapes follow the module)
# ----------------------------------------------------------------------------
def _init_mlp_base(key, in_dim, hidden):
    k1, k2 = jax.random.split(key)
    return {
        "g0": jnp.ones((1, in_dim), jnp.float32),
        "b0": jnp.zeros((1, in_dim), jnp.float32),
        "w1": 0.1 * jax.random.normal(k1, (in_dim, hidden), jnp.float32),
        "bb1": jnp.zeros((1, hidden), jnp.float32),
        "g1": jnp.ones((1, hidden), jnp.float32),
        "bt1": jnp.zeros((1, hidden), jnp.float32),
        "w2": 0.1 * jax.random.normal(k2, (hidden, hidden), jnp.float32),
        "bb2": jnp.zeros((1, hidden), jnp.float32),
        "g2": jnp.ones((1, hidden), jnp.float32),
        "bt2": jnp.zeros((1, hidden), jnp.float32),
    }


def _init_gru_layer(key, hidden):
    k1, k2 = jax.random.split(key)
    # columns grouped [r | z | n] (already transposed relative to torch's (3H, in))
    return {
        "wih": 0.1 * jax.random.normal(k1, (hidden, 3 * hidden), jnp.float32),
        "whh": 0.1 * jax.random.normal(k2, (hidden, 3 * hidden), jnp.float32),
        "bih": jnp.zeros((1, 3 * hidden), jnp.float32),
        "bhh": jnp.zeros((1, 3 * hidden), jnp.float32),
    }


def init_r_actor_params(key, obs_dim, max_z, hidden, recurrent_n, action_dim):
    keys = jax.random.split(key, 5 + recurrent_n)
    return {
        "base": _init_mlp_base(keys[0], obs_dim - max_z, hidden),
        "z_base": _init_mlp_base(keys[1], max_z, hidden),
        "base2": _init_mlp_base(keys[2], hidden * 2, hidden),
        "gru": [_init_gru_layer(keys[5 + l], hidden) for l in range(recurrent_n)],
        "rnn_norm": {"g": jnp.ones((1, hidden), jnp.float32),
                     "b": jnp.zeros((1, hidden), jnp.float32)},
        "act": {"w": 0.1 * jax.random.normal(keys[3], (hidden, action_dim), jnp.float32),
                "b": jnp.zeros((1, action_dim), jnp.float32)},
    }


# ----------------------------------------------------------------------------
# one-time parameter packing: two slabs (bf16 matmul weights + f32 LN/bias rows)
# ----------------------------------------------------------------------------
def prepare_padded_params(params, *, obs_dim, max_z, hidden, action_dim):
    d_z, d_base, H, A = max_z, obs_dim - max_z, hidden, action_dim
    L = len(params["gru"])
    HP, AP = _round_up(H, LANE), _round_up(A, LANE)
    DP = _round_up(obs_dim, LANE)
    WW = max(3 * HP, 2 * HP, AP)                 # weight-slab lane width
    BW = max(DP, 3 * HP, 2 * HP, AP)             # bias-slab lane width

    b, z, b2 = params["base"], params["z_base"], params["base2"]

    def zeros(r, c):
        return jnp.zeros((r, c), jnp.float32)

    # ---- matmul weights (one bf16 slab) --------------------------------------
    w_entries = []

    # block-diagonal fused first Linear of base / z_base over the packed obs slab
    w1_bd = zeros(DP, 2 * HP)
    w1_bd = w1_bd.at[d_z:d_z + d_base, 0:H].set(b["w1"])   # base rows -> cols [0:HP)
    w1_bd = w1_bd.at[0:d_z, HP:HP + H].set(z["w1"])        # z rows    -> cols [HP:2HP)
    w_entries.append(("w1_bd", w1_bd))

    w_entries.append(("b_w2", zeros(HP, HP).at[:H, :H].set(b["w2"])))
    w_entries.append(("z_w2", zeros(HP, HP).at[:H, :H].set(z["w2"])))

    for l, lp in enumerate(params["gru"]):
        wih = zeros(HP, 3 * HP)
        whh = zeros(HP, 3 * HP)
        for g in range(3):      # r, z, n
            wih = wih.at[:H, g * HP:g * HP + H].set(lp["wih"][:, g * H:(g + 1) * H])
            whh = whh.at[:H, g * HP:g * HP + H].set(lp["whh"][:, g * H:(g + 1) * H])
        w_entries.append((f"gru_wih_{l}", wih))
        w_entries.append((f"gru_whh_{l}", whh))

    # base2 first Linear stacked over the lane-aligned concat [rnn_out | z_feat]
    c_w1 = zeros(2 * HP, HP)
    c_w1 = c_w1.at[0:H, :H].set(b2["w1"][:H, :])
    c_w1 = c_w1.at[HP:HP + H, :H].set(b2["w1"][H:, :])
    w_entries.append(("c_w1", c_w1))
    w_entries.append(("c_w2", zeros(HP, HP).at[:H, :H].set(b2["w2"])))
    w_entries.append(("act_w", zeros(HP, AP).at[:H, :A].set(params["act"]["w"])))

    woff, rows, w_blocks = {}, 0, []
    for name, arr in w_entries:
        r, c = arr.shape
        woff[name] = (rows, r, c)
        w_blocks.append(jnp.pad(arr, ((0, 0), (0, WW - c))))
        rows += r
    w_slab = jnp.concatenate(w_blocks, axis=0).astype(MXU_DTYPE)

    # ---- LayerNorm params & biases (one f32 slab; 8 rows per entry for
    #      aligned static sub-views) -------------------------------------------
    def rowvec(c, pieces):
        v = zeros(1, c)
        for off, p in pieces:
            v = v.at[:, off:off + p.shape[1]].set(p)
        return v

    b_entries = [
        ("in_g", rowvec(DP, [(0, z["g0"]), (d_z, b["g0"])])),
        ("in_b", rowvec(DP, [(0, z["b0"]), (d_z, b["b0"])])),
        ("bb1_bd", rowvec(2 * HP, [(0, b["bb1"]), (HP, z["bb1"])])),
        ("b_g1", rowvec(HP, [(0, b["g1"])])),
        ("b_bt1", rowvec(HP, [(0, b["bt1"])])),
        ("b_bb2", rowvec(HP, [(0, b["bb2"])])),
        ("b_g2", rowvec(HP, [(0, b["g2"])])),
        ("b_bt2", rowvec(HP, [(0, b["bt2"])])),
        ("z_g1", rowvec(HP, [(0, z["g1"])])),
        ("z_bt1", rowvec(HP, [(0, z["bt1"])])),
        ("z_bb2", rowvec(HP, [(0, z["bb2"])])),
        ("z_g2", rowvec(HP, [(0, z["g2"])])),
        ("z_bt2", rowvec(HP, [(0, z["bt2"])])),
    ]
    for l, lp in enumerate(params["gru"]):
        b_entries.append((f"gru_bih_{l}", rowvec(
            3 * HP, [(g * HP, lp["bih"][:, g * H:(g + 1) * H]) for g in range(3)])))
        b_entries.append((f"gru_bhh_{l}", rowvec(
            3 * HP, [(g * HP, lp["bhh"][:, g * H:(g + 1) * H]) for g in range(3)])))
    b_entries += [
        ("rnn_g", rowvec(HP, [(0, params["rnn_norm"]["g"])])),
        ("rnn_b", rowvec(HP, [(0, params["rnn_norm"]["b"])])),
        ("c_g0", rowvec(2 * HP, [(0, b2["g0"][:, :H]), (HP, b2["g0"][:, H:])])),
        ("c_b0", rowvec(2 * HP, [(0, b2["b0"][:, :H]), (HP, b2["b0"][:, H:])])),
        ("c_bb1", rowvec(HP, [(0, b2["bb1"])])),
        ("c_g1", rowvec(HP, [(0, b2["g1"])])),
        ("c_bt1", rowvec(HP, [(0, b2["bt1"])])),
        ("c_bb2", rowvec(HP, [(0, b2["bb2"])])),
        ("c_g2", rowvec(HP, [(0, b2["g2"])])),
        ("c_bt2", rowvec(HP, [(0, b2["bt2"])])),
        ("act_b", rowvec(AP, [(0, params["act"]["b"])])),
    ]

    boff, b_blocks = {}, []
    for k, (name, vec) in enumerate(b_entries):
        boff[name] = (8 * k, vec.shape[1])
        b_blocks.append(jnp.pad(vec, ((0, 7), (0, BW - vec.shape[1]))))
    b_slab = jnp.concatenate(b_blocks, axis=0)        # (8 * n_entries, BW) f32

    meta = dict(d_z=d_z, d_base=d_base, h=H, a=A, L=L,
                DP=DP, HP=HP, AP=AP, woff=woff, boff=boff)
    return w_slab, b_slab, meta


# ----------------------------------------------------------------------------
if __name__ == "__main__":
    B = 8            # batch (threads * agents)
    MAX_Z = 4
    OBS_DIM = 20     # base sees OBS_DIM - MAX_Z = 16 features
    HIDDEN = 32
    RECURRENT_N = 1
    ACTION_DIM = 5   # Discrete(5)

    key = jax.random.PRNGKey(0)
    kp, ko, kh = jax.random.split(key, 3)

    raw_params = init_r_actor_params(kp, OBS_DIM, MAX_Z, HIDDEN,
                                     RECURRENT_N, ACTION_DIM)
    w_slab, b_slab, meta = prepare_padded_params(
        raw_params, obs_dim=OBS_DIM, max_z=MAX_Z,
        hidden=HIDDEN, action_dim=ACTION_DIM)

    obs = jax.random.normal(ko, (B, OBS_DIM), jnp.float32)
    rnn_states = jax.random.normal(kh, (B, RECURRENT_N, HIDDEN), jnp.float32)
    masks = jnp.ones((B, 1), jnp.float32).at[0, 0].set(0.0)  # one reset hidden

    @jax.jit
    def run(w, bs, obs_, rnn_, masks_):
        return r_actor_forward(w, bs, meta, obs_, rnn_, masks_)

    actions, action_log_probs, rnn_states_new = run(w_slab, b_slab, obs,
                                                    rnn_states, masks)
    jax.block_until_ready((actions, action_log_probs, rnn_states_new))

    assert actions.shape == (B, 1) and actions.dtype == jnp.int32
    assert action_log_probs.shape == (B, 1)
    assert rnn_states_new.shape == (B, RECURRENT_N, HIDDEN)
    assert bool(jnp.all((actions >= 0) & (actions < ACTION_DIM)))
    assert bool(jnp.all(jnp.isfinite(action_log_probs)))
    assert bool(jnp.all(jnp.isfinite(rnn_states_new)))

    # verify against the pure-JAX reference (same packed bf16 params)
    ref_logits, ref_actions, ref_logp, ref_hnew = r_actor_reference(
        w_slab, b_slab, meta, obs, rnn_states, masks)
    assert bool(jnp.all(jnp.abs(action_log_probs - ref_logp) < 2e-3))
    assert bool(jnp.all(jnp.abs(rnn_states_new - ref_hnew) < 2e-3))
    top2 = jnp.sort(ref_logits[:, :ACTION_DIM], axis=-1)[:, -2:]
    clear = (top2[:, 1] - top2[:, 0]) > 1e-3          # ignore numerical near-ties
    assert bool(jnp.all(jnp.where(clear, actions[:, 0] == ref_actions[:, 0], True)))

    print("KERNEL_OK")
</pallas_src>

<mosaic_0001>
module attributes {stable_mosaic.version = 11 : i64} {
  func.func @kernel(%arg0: i32, %arg1: memref<8x128xf32, #tpu.memory_space<vmem>>, %arg2: memref<8x128xf32, #tpu.memory_space<vmem>>, %arg3: memref<8x1xf32, #tpu.memory_space<vmem>>, %arg4: memref<1152x384xbf16, #tpu.memory_space<vmem>>, %arg5: memref<208x384xf32, #tpu.memory_space<vmem>>, %arg6: memref<8x128xf32, #tpu.memory_space<vmem>>, %arg7: memref<8x128xf32, #tpu.memory_space<vmem>>) attributes {dimension_semantics = [#tpu.dimension_semantics<parallel>], iteration_bounds = array<i64: 1>, scalar_prefetch = 0 : i64, scratch_operands = 0 : i64, tpu.core_type = #tpu.core_type<tc>, window_params = [{transform_indices = @transform_0, window_bounds = array<i64: 8, 128>}, {transform_indices = @transform_1, window_bounds = array<i64: 8, 128>}, {transform_indices = @transform_2, window_bounds = array<i64: 8, 1>}, {pipeline_mode = #tpu.pipeline_mode<synchronous>, transform_indices = @transform_3, window_bounds = array<i64: 1152, 384>}, {pipeline_mode = #tpu.pipeline_mode<synchronous>, transform_indices = @transform_4, window_bounds = array<i64: 208, 384>}, {transform_indices = @transform_5, window_bounds = array<i64: 8, 128>}, {transform_indices = @transform_6, window_bounds = array<i64: 8, 128>}]} {
    %c0 = arith.constant 0 : index
    %c0_0 = arith.constant 0 : index
    %0 = vector.load %arg1[%c0, %c0_0] : memref<8x128xf32, #tpu.memory_space<vmem>>, vector<8x128xf32>
    %c0_1 = arith.constant 0 : index
    %c0_2 = arith.constant 0 : index
    %1 = vector.load %arg3[%c0_1, %c0_2] : memref<8x1xf32, #tpu.memory_space<vmem>>, vector<8x1xf32>
    %2 = tpu.iota {dimensions = array<i32: 1>} : vector<1x128xi32>
    %c0_i32 = arith.constant 0 : i32
    %3 = vector.broadcast %c0_i32 : i32 to vector<1x128xi32>
    %4 = arith.cmpi sge, %2, %3 : vector<1x128xi32>
    %c4_i32 = arith.constant 4 : i32
    %5 = vector.broadcast %c4_i32 : i32 to vector<1x128xi32>
    %6 = arith.cmpi slt, %2, %5 : vector<1x128xi32>
    %7 = arith.andi %4, %6 : vector<1x128xi1>
    %8 = arith.extui %7 : vector<1x128xi1> to vector<1x128xi32>
    %9 = arith.sitofp %8 : vector<1x128xi32> to vector<1x128xf32>
    %10 = tpu.iota {dimensions = array<i32: 1>} : vector<1x128xi32>
    %c4_i32_3 = arith.constant 4 : i32
    %11 = vector.broadcast %c4_i32_3 : i32 to vector<1x128xi32>
    %12 = arith.cmpi sge, %10, %11 : vector<1x128xi32>
    %c20_i32 = arith.constant 20 : i32
    %13 = vector.broadcast %c20_i32 : i32 to vector<1x128xi32>
    %14 = arith.cmpi slt, %10, %13 : vector<1x128xi32>
    %15 = arith.andi %12, %14 : vector<1x128xi1>
    %16 = arith.extui %15 : vector<1x128xi1> to vector<1x128xi32>
    %17 = arith.sitofp %16 : vector<1x128xi32> to vector<1x128xf32>
    %18 = tpu.iota {dimensions = array<i32: 1>} : vector<1x128xi32>
    %c0_i32_4 = arith.constant 0 : i32
    %19 = vector.broadcast %c0_i32_4 : i32 to vector<1x128xi32>
    %20 = arith.cmpi sge, %18, %19 : vector<1x128xi32>
    %c32_i32 = arith.constant 32 : i32
    %21 = vector.broadcast %c32_i32 : i32 to vector<1x128xi32>
    %22 = arith.cmpi slt, %18, %21 : vector<1x128xi32>
    %23 = arith.andi %20, %22 : vector<1x128xi1>
    %24 = arith.extui %23 : vector<1x128xi1> to vector<1x128xi32>
    %25 = arith.sitofp %24 : vector<1x128xi32> to vector<1x128xf32>
    %26 = tpu.iota {dimensions = array<i32: 1>} : vector<1x256xi32>
    %c0_i32_5 = arith.constant 0 : i32
    %27 = vector.broadcast %c0_i32_5 : i32 to vector<1x256xi32>
    %28 = arith.cmpi sge, %26, %27 : vector<1x256xi32>
    %c32_i32_6 = arith.constant 32 : i32
    %29 = vector.broadcast %c32_i32_6 : i32 to vector<1x256xi32>
    %30 = arith.cmpi slt, %26, %29 : vector<1x256xi32>
    %31 = arith.andi %28, %30 : vector<1x256xi1>
    %32 = arith.extui %31 : vector<1x256xi1> to vector<1x256xi32>
    %33 = arith.sitofp %32 : vector<1x256xi32> to vector<1x256xf32>
    %34 = tpu.iota {dimensions = array<i32: 1>} : vector<1x256xi32>
    %c128_i32 = arith.constant 128 : i32
    %35 = vector.broadcast %c128_i32 : i32 to vector<1x256xi32>
    %36 = arith.cmpi sge, %34, %35 : vector<1x256xi32>
    %c160_i32 = arith.constant 160 : i32
    %37 = vector.broadcast %c160_i32 : i32 to vector<1x256xi32>
    %38 = arith.cmpi slt, %34, %37 : vector<1x256xi32>
    %39 = arith.andi %36, %38 : vector<1x256xi1>
    %40 = arith.extui %39 : vector<1x256xi1> to vector<1x256xi32>
    %41 = arith.sitofp %40 : vector<1x256xi32> to vector<1x256xf32>
    %42 = arith.addf %33, %41 : vector<1x256xf32>
    %c0_7 = arith.constant 0 : index
    %c0_8 = arith.constant 0 : index
    %43 = vector.load %arg5[%c0_7, %c0_8] : memref<208x384xf32, #tpu.memory_space<vmem>>, vector<1x128xf32>
    %c8 = arith.constant 8 : index
    %c0_9 = arith.constant 0 : index
    %44 = vector.load %arg5[%c8, %c0_9] : memref<208x384xf32, #tpu.memory_space<vmem>>, vector<1x128xf32>
    %45 = vector.broadcast %9 : vector<1x128xf32> to vector<8x128xf32>
    %46 = arith.mulf %0, %45 : vector<8x128xf32>
    %cst = arith.constant dense<0.000000e+00> : vector<8xf32>
    %47 = vector.multi_reduction <add>, %46, %cst [1] : vector<8x128xf32> to vector<8xf32>
    %48 = vector.shape_cast %47 : vector<8xf32> to vector<8x1xf32>
    %cst_10 = arith.constant 2.500000e-01 : f32
    %49 = vector.broadcast %cst_10 : f32 to vector<8x1xf32>
    %50 = arith.mulf %48, %49 : vector<8x1xf32>
    %51 = vector.broadcast %50 : vector<8x1xf32> to vector<8x128xf32>
    %52 = arith.subf %0, %51 : vector<8x128xf32>
    %53 = vector.broadcast %9 : vector<1x128xf32> to vector<8x128xf32>
    %54 = arith.mulf %52, %53 : vector<8x128xf32>
    %55 = arith.mulf %54, %54 : vector<8x128xf32>
    %cst_11 = arith.constant dense<0.000000e+00> : vector<8xf32>
    %56 = vector.multi_reduction <add>, %55, %cst_11 [1] : vector<8x128xf32> to vector<8xf32>
    %57 = vector.shape_cast %56 : vector<8xf32> to vector<8x1xf32>
    %cst_12 = arith.constant 2.500000e-01 : f32
    %58 = vector.broadcast %cst_12 : f32 to vector<8x1xf32>
    %59 = arith.mulf %57, %58 : vector<8x1xf32>
    %60 = vector.broadcast %50 : vector<8x1xf32> to vector<8x128xf32>
    %61 = arith.subf %0, %60 : vector<8x128xf32>
    %cst_13 = arith.constant 9.99999974E-6 : f32
    %62 = vector.broadcast %cst_13 : f32 to vector<8x1xf32>
    %63 = arith.addf %59, %62 : vector<8x1xf32>
    %64 = math.rsqrt %63 : vector<8x1xf32>
    %65 = vector.broadcast %64 : vector<8x1xf32> to vector<8x128xf32>
    %66 = arith.mulf %61, %65 : vector<8x128xf32>
    %67 = vector.broadcast %43 : vector<1x128xf32> to vector<8x128xf32>
    %68 = arith.mulf %66, %67 : vector<8x128xf32>
    %69 = vector.broadcast %44 : vector<1x128xf32> to vector<8x128xf32>
    %70 = arith.addf %68, %69 : vector<8x128xf32>
    %71 = vector.broadcast %17 : vector<1x128xf32> to vector<8x128xf32>
    %72 = arith.mulf %0, %71 : vector<8x128xf32>
    %cst_14 = arith.constant dense<0.000000e+00> : vector<8xf32>
    %73 = vector.multi_reduction <add>, %72, %cst_14 [1] : vector<8x128xf32> to vector<8xf32>
    %74 = vector.shape_cast %73 : vector<8xf32> to vector<8x1xf32>
    %cst_15 = arith.constant 6.250000e-02 : f32
    %75 = vector.broadcast %cst_15 : f32 to vector<8x1xf32>
    %76 = arith.mulf %74, %75 : vector<8x1xf32>
    %77 = vector.broadcast %76 : vector<8x1xf32> to vector<8x128xf32>
    %78 = arith.subf %0, %77 : vector<8x128xf32>
    %79 = vector.broadcast %17 : vector<1x128xf32> to vector<8x128xf32>
    %80 = arith.mulf %78, %79 : vector<8x128xf32>
    %81 = arith.mulf %80, %80 : vector<8x128xf32>
    %cst_16 = arith.constant dense<0.000000e+00> : vector<8xf32>
    %82 = vector.multi_reduction <add>, %81, %cst_16 [1] : vector<8x128xf32> to vector<8xf32>
    %83 = vector.shape_cast %82 : vector<8xf32> to vector<8x1xf32>
    %cst_17 = arith.constant 6.250000e-02 : f32
    %84 = vector.broadcast %cst_17 : f32 to vector<8x1xf32>
    %85 = arith.mulf %83, %84 : vector<8x1xf32>
    %86 = vector.broadcast %76 : vector<8x1xf32> to vector<8x128xf32>
    %87 = arith.subf %0, %86 : vector<8x128xf32>
    %cst_18 = arith.constant 9.99999974E-6 : f32
    %88 = vector.broadcast %cst_18 : f32 to vector<8x1xf32>
    %89 = arith.addf %85, %88 : vector<8x1xf32>
    %90 = math.rsqrt %89 : vector<8x1xf32>
    %91 = vector.broadcast %90 : vector<8x1xf32> to vector<8x128xf32>
    %92 = arith.mulf %87, %91 : vector<8x128xf32>
    %93 = vector.broadcast %43 : vector<1x128xf32> to vector<8x128xf32>
    %94 = arith.mulf %92, %93 : vector<8x128xf32>
    %95 = vector.broadcast %44 : vector<1x128xf32> to vector<8x128xf32>
    %96 = arith.addf %94, %95 : vector<8x128xf32>
    %97 = vector.broadcast %9 : vector<1x128xf32> to vector<8x128xf32>
    %98 = arith.mulf %70, %97 : vector<8x128xf32>
    %99 = vector.broadcast %17 : vector<1x128xf32> to vector<8x128xf32>
    %100 = arith.mulf %96, %99 : vector<8x128xf32>
    %101 = arith.addf %98, %100 : vector<8x128xf32>
    %c0_19 = arith.constant 0 : index
    %c0_20 = arith.constant 0 : index
    %102 = vector.load %arg4[%c0_19, %c0_20] : memref<1152x384xbf16, #tpu.memory_space<vmem>>, vector<128x256xbf16>
    %103 = arith.truncf %101 : vector<8x128xf32> to vector<8x128xbf16>
    %cst_21 = arith.constant dense<0.000000e+00> : vector<8x256xf32>
    %104 = tpu.matmul %103, %102, %cst_21 {dimension_numbers = #tpu.dot_dimension_numbers<[1], [0], [0], [1], [0, 0, 1, 1], [], []>} : vector<8x128xbf16>, vector<128x256xbf16>, vector<8x256xf32> -> vector<8x256xf32>
    %c16 = arith.constant 16 : index
    %c0_22 = arith.constant 0 : index
    %105 = vector.load %arg5[%c16, %c0_22] : memref<208x384xf32, #tpu.memory_space<vmem>>, vector<1x256xf32>
    %106 = vector.broadcast %105 : vector<1x256xf32> to vector<8x256xf32>
    %107 = arith.addf %104, %106 : vector<8x256xf32>
    %cst_23 = arith.constant 0.000000e+00 : f32
    %108 = vector.broadcast %cst_23 : f32 to vector<8x256xf32>
    %109 = arith.maximumf %107, %108 : vector<8x256xf32>
    %110 = vector.extract_strided_slice %109 {offsets = [0, 0], sizes = [8, 128], strides = [1, 1]} : vector<8x256xf32> to vector<8x128xf32>
    %c24 = arith.constant 24 : index
    %c0_24 = arith.constant 0 : index
    %111 = vector.load %arg5[%c24, %c0_24] : memref<208x384xf32, #tpu.memory_space<vmem>>, vector<1x128xf32>
    %c32 = arith.constant 32 : index
    %c0_25 = arith.constant 0 : index
    %112 = vector.load %arg5[%c32, %c0_25] : memref<208x384xf32, #tpu.memory_space<vmem>>, vector<1x128xf32>
    %113 = vector.broadcast %25 : vector<1x128xf32> to vector<8x128xf32>
    %114 = arith.mulf %110, %113 : vector<8x128xf32>
    %cst_26 = arith.constant dense<0.000000e+00> : vector<8xf32>
    %115 = vector.multi_reduction <add>, %114, %cst_26 [1] : vector<8x128xf32> to vector<8xf32>
    %116 = vector.shape_cast %115 : vector<8xf32> to vector<8x1xf32>
    %cst_27 = arith.constant 3.125000e-02 : f32
    %117 = vector.broadcast %cst_27 : f32 to vector<8x1xf32>
    %118 = arith.mulf %116, %117 : vector<8x1xf32>
    %119 = vector.broadcast %118 : vector<8x1xf32> to vector<8x128xf32>
    %120 = arith.subf %110, %119 : vector<8x128xf32>
    %121 = vector.broadcast %25 : vector<1x128xf32> to vector<8x128xf32>
    %122 = arith.mulf %120, %121 : vector<8x128xf32>
    %123 = arith.mulf %122, %122 : vector<8x128xf32>
    %cst_28 = arith.constant dense<0.000000e+00> : vector<8xf32>
    %124 = vector.multi_reduction <add>, %123, %cst_28 [1] : vector<8x128xf32> to vector<8xf32>
    %125 = vector.shape_cast %124 : vector<8xf32> to vector<8x1xf32>
    %cst_29 = arith.constant 3.125000e-02 : f32
    %126 = vector.broadcast %cst_29 : f32 to vector<8x1xf32>
    %127 = arith.mulf %125, %126 : vector<8x1xf32>
    %128 = vector.broadcast %118 : vector<8x1xf32> to vector<8x128xf32>
    %129 = arith.subf %110, %128 : vector<8x128xf32>
    %cst_30 = arith.constant 9.99999974E-6 : f32
    %130 = vector.broadcast %cst_30 : f32 to vector<8x1xf32>
    %131 = arith.addf %127, %130 : vector<8x1xf32>
    %132 = math.rsqrt %131 : vector<8x1xf32>
    %133 = vector.broadcast %132 : vector<8x1xf32> to vector<8x128xf32>
    %134 = arith.mulf %129, %133 : vector<8x128xf32>
    %135 = vector.broadcast %111 : vector<1x128xf32> to vector<8x128xf32>
    %136 = arith.mulf %134, %135 : vector<8x128xf32>
    %137 = vector.broadcast %112 : vector<1x128xf32> to vector<8x128xf32>
    %138 = arith.addf %136, %137 : vector<8x128xf32>
    %c128 = arith.constant 128 : index
    %c0_31 = arith.constant 0 : index
    %139 = vector.load %arg4[%c128, %c0_31] : memref<1152x384xbf16, #tpu.memory_space<vmem>>, vector<128x128xbf16>
    %140 = arith.truncf %138 : vector<8x128xf32> to vector<8x128xbf16>
    %cst_32 = arith.constant dense<0.000000e+00> : vector<8x128xf32>
    %141 = tpu.matmul %140, %139, %cst_32 {dimension_numbers = #tpu.dot_dimension_numbers<[1], [0], [0], [1], [0, 0, 1, 1], [], []>} : vector<8x128xbf16>, vector<128x128xbf16>, vector<8x128xf32> -> vector<8x128xf32>
    %c40 = arith.constant 40 : index
    %c0_33 = arith.constant 0 : index
    %142 = vector.load %arg5[%c40, %c0_33] : memref<208x384xf32, #tpu.memory_space<vmem>>, vector<1x128xf32>
    %143 = vector.broadcast %142 : vector<1x128xf32> to vector<8x128xf32>
    %144 = arith.addf %141, %143 : vector<8x128xf32>
    %cst_34 = arith.constant 0.000000e+00 : f32
    %145 = vector.broadcast %cst_34 : f32 to vector<8x128xf32>
    %146 = arith.maximumf %144, %145 : vector<8x128xf32>
    %c48 = arith.constant 48 : index
    %c0_35 = arith.constant 0 : index
    %147 = vector.load %arg5[%c48, %c0_35] : memref<208x384xf32, #tpu.memory_space<vmem>>, vector<1x128xf32>
    %c56 = arith.constant 56 : index
    %c0_36 = arith.constant 0 : index
    %148 = vector.load %arg5[%c56, %c0_36] : memref<208x384xf32, #tpu.memory_space<vmem>>, vector<1x128xf32>
    %149 = vector.broadcast %25 : vector<1x128xf32> to vector<8x128xf32>
    %150 = arith.mulf %146, %149 : vector<8x128xf32>
    %cst_37 = arith.constant dense<0.000000e+00> : vector<8xf32>
    %151 = vector.multi_reduction <add>, %150, %cst_37 [1] : vector<8x128xf32> to vector<8xf32>
    %152 = vector.shape_cast %151 : vector<8xf32> to vector<8x1xf32>
    %cst_38 = arith.constant 3.125000e-02 : f32
    %153 = vector.broadcast %cst_38 : f32 to vector<8x1xf32>
    %154 = arith.mulf %152, %153 : vector<8x1xf32>
    %155 = vector.broadcast %154 : vector<8x1xf32> to vector<8x128xf32>
    %156 = arith.subf %146, %155 : vector<8x128xf32>
    %157 = vector.broadcast %25 : vector<1x128xf32> to vector<8x128xf32>
    %158 = arith.mulf %156, %157 : vector<8x128xf32>
    %159 = arith.mulf %158, %158 : vector<8x128xf32>
    %cst_39 = arith.constant dense<0.000000e+00> : vector<8xf32>
    %160 = vector.multi_reduction <add>, %159, %cst_39 [1] : vector<8x128xf32> to vector<8xf32>
    %161 = vector.shape_cast %160 : vector<8xf32> to vector<8x1xf32>
    %cst_40 = arith.constant 3.125000e-02 : f32
    %162 = vector.broadcast %cst_40 : f32 to vector<8x1xf32>
    %163 = arith.mulf %161, %162 : vector<8x1xf32>
    %164 = vector.broadcast %154 : vector<8x1xf32> to vector<8x128xf32>
    %165 = arith.subf %146, %164 : vector<8x128xf32>
    %cst_41 = arith.constant 9.99999974E-6 : f32
    %166 = vector.broadcast %cst_41 : f32 to vector<8x1xf32>
    %167 = arith.addf %163, %166 : vector<8x1xf32>
    %168 = math.rsqrt %167 : vector<8x1xf32>
    %169 = vector.broadcast %168 : vector<8x1xf32> to vector<8x128xf32>
    %170 = arith.mulf %165, %169 : vector<8x128xf32>
    %171 = vector.broadcast %147 : vector<1x128xf32> to vector<8x128xf32>
    %172 = arith.mulf %170, %171 : vector<8x128xf32>
    %173 = vector.broadcast %148 : vector<1x128xf32> to vector<8x128xf32>
    %174 = arith.addf %172, %173 : vector<8x128xf32>
    %175 = vector.extract_strided_slice %109 {offsets = [0, 128], sizes = [8, 128], strides = [1, 1]} : vector<8x256xf32> to vector<8x128xf32>
    %c64 = arith.constant 64 : index
    %c0_42 = arith.constant 0 : index
    %176 = vector.load %arg5[%c64, %c0_42] : memref<208x384xf32, #tpu.memory_space<vmem>>, vector<1x128xf32>
    %c72 = arith.constant 72 : index
    %c0_43 = arith.constant 0 : index
    %177 = vector.load %arg5[%c72, %c0_43] : memref<208x384xf32, #tpu.memory_space<vmem>>, vector<1x128xf32>
    %178 = vector.broadcast %25 : vector<1x128xf32> to vector<8x128xf32>
    %179 = arith.mulf %175, %178 : vector<8x128xf32>
    %cst_44 = arith.constant dense<0.000000e+00> : vector<8xf32>
    %180 = vector.multi_reduction <add>, %179, %cst_44 [1] : vector<8x128xf32> to vector<8xf32>
    %181 = vector.shape_cast %180 : vector<8xf32> to vector<8x1xf32>
    %cst_45 = arith.constant 3.125000e-02 : f32
    %182 = vector.broadcast %cst_45 : f32 to vector<8x1xf32>
    %183 = arith.mulf %181, %182 : vector<8x1xf32>
    %184 = vector.broadcast %183 : vector<8x1xf32> to vector<8x128xf32>
    %185 = arith.subf %175, %184 : vector<8x128xf32>
    %186 = vector.broadcast %25 : vector<1x128xf32> to vector<8x128xf32>
    %187 = arith.mulf %185, %186 : vector<8x128xf32>
    %188 = arith.mulf %187, %187 : vector<8x128xf32>
    %cst_46 = arith.constant dense<0.000000e+00> : vector<8xf32>
    %189 = vector.multi_reduction <add>, %188, %cst_46 [1] : vector<8x128xf32> to vector<8xf32>
    %190 = vector.shape_cast %189 : vector<8xf32> to vector<8x1xf32>
    %cst_47 = arith.constant 3.125000e-02 : f32
    %191 = vector.broadcast %cst_47 : f32 to vector<8x1xf32>
    %192 = arith.mulf %190, %191 : vector<8x1xf32>
    %193 = vector.broadcast %183 : vector<8x1xf32> to vector<8x128xf32>
    %194 = arith.subf %175, %193 : vector<8x128xf32>
    %cst_48 = arith.constant 9.99999974E-6 : f32
    %195 = vector.broadcast %cst_48 : f32 to vector<8x1xf32>
    %196 = arith.addf %192, %195 : vector<8x1xf32>
    %197 = math.rsqrt %196 : vector<8x1xf32>
    %198 = vector.broadcast %197 : vector<8x1xf32> to vector<8x128xf32>
    %199 = arith.mulf %194, %198 : vector<8x128xf32>
    %200 = vector.broadcast %176 : vector<1x128xf32> to vector<8x128xf32>
    %201 = arith.mulf %199, %200 : vector<8x128xf32>
    %202 = vector.broadcast %177 : vector<1x128xf32> to vector<8x128xf32>
    %203 = arith.addf %201, %202 : vector<8x128xf32>
    %c256 = arith.constant 256 : index
    %c0_49 = arith.constant 0 : index
    %204 = vector.load %arg4[%c256, %c0_49] : memref<1152x384xbf16, #tpu.memory_space<vmem>>, vector<128x128xbf16>
    %205 = arith.truncf %203 : vector<8x128xf32> to vector<8x128xbf16>
    %cst_50 = arith.constant dense<0.000000e+00> : vector<8x128xf32>
    %206 = tpu.matmul %205, %204, %cst_50 {dimension_numbers = #tpu.dot_dimension_numbers<[1], [0], [0], [1], [0, 0, 1, 1], [], []>} : vector<8x128xbf16>, vector<128x128xbf16>, vector<8x128xf32> -> vector<8x128xf32>
    %c80 = arith.constant 80 : index
    %c0_51 = arith.constant 0 : index
    %207 = vector.load %arg5[%c80, %c0_51] : memref<208x384xf32, #tpu.memory_space<vmem>>, vector<1x128xf32>
    %208 = vector.broadcast %207 : vector<1x128xf32> to vector<8x128xf32>
    %209 = arith.addf %206, %208 : vector<8x128xf32>
    %cst_52 = arith.constant 0.000000e+00 : f32
    %210 = vector.broadcast %cst_52 : f32 to vector<8x128xf32>
    %211 = arith.maximumf %209, %210 : vector<8x128xf32>
    %c88 = arith.constant 88 : index
    %c0_53 = arith.constant 0 : index
    %212 = vector.load %arg5[%c88, %c0_53] : memref<208x384xf32, #tpu.memory_space<vmem>>, vector<1x128xf32>
    %c96 = arith.constant 96 : index
    %c0_54 = arith.constant 0 : index
    %213 = vector.load %arg5[%c96, %c0_54] : memref<208x384xf32, #tpu.memory_space<vmem>>, vector<1x128xf32>
    %214 = vector.broadcast %25 : vector<1x128xf32> to vector<8x128xf32>
    %215 = arith.mulf %211, %214 : vector<8x128xf32>
    %cst_55 = arith.constant dense<0.000000e+00> : vector<8xf32>
    %216 = vector.multi_reduction <add>, %215, %cst_55 [1] : vector<8x128xf32> to vector<8xf32>
    %217 = vector.shape_cast %216 : vector<8xf32> to vector<8x1xf32>
    %cst_56 = arith.constant 3.125000e-02 : f32
    %218 = vector.broadcast %cst_56 : f32 to vector<8x1xf32>
    %219 = arith.mulf %217, %218 : vector<8x1xf32>
    %220 = vector.broadcast %219 : vector<8x1xf32> to vector<8x128xf32>
    %221 = arith.subf %211, %220 : vector<8x128xf32>
    %222 = vector.broadcast %25 : vector<1x128xf32> to vector<8x128xf32>
    %223 = arith.mulf %221, %222 : vector<8x128xf32>
    %224 = arith.mulf %223, %223 : vector<8x128xf32>
    %cst_57 = arith.constant dense<0.000000e+00> : vector<8xf32>
    %225 = vector.multi_reduction <add>, %224, %cst_57 [1] : vector<8x128xf32> to vector<8xf32>
    %226 = vector.shape_cast %225 : vector<8xf32> to vector<8x1xf32>
    %cst_58 = arith.constant 3.125000e-02 : f32
    %227 = vector.broadcast %cst_58 : f32 to vector<8x1xf32>
    %228 = arith.mulf %226, %227 : vector<8x1xf32>
    %229 = vector.broadcast %219 : vector<8x1xf32> to vector<8x128xf32>
    %230 = arith.subf %211, %229 : vector<8x128xf32>
    %cst_59 = arith.constant 9.99999974E-6 : f32
    %231 = vector.broadcast %cst_59 : f32 to vector<8x1xf32>
    %232 = arith.addf %228, %231 : vector<8x1xf32>
    %233 = math.rsqrt %232 : vector<8x1xf32>
    %234 = vector.broadcast %233 : vector<8x1xf32> to vector<8x128xf32>
    %235 = arith.mulf %230, %234 : vector<8x128xf32>
    %236 = vector.broadcast %212 : vector<1x128xf32> to vector<8x128xf32>
    %237 = arith.mulf %235, %236 : vector<8x128xf32>
    %238 = vector.broadcast %213 : vector<1x128xf32> to vector<8x128xf32>
    %239 = arith.addf %237, %238 : vector<8x128xf32>
    %c0_60 = arith.constant 0 : index
    %c0_61 = arith.constant 0 : index
    %240 = vector.load %arg2[%c0_60, %c0_61] : memref<8x128xf32, #tpu.memory_space<vmem>>, vector<8x128xf32>
    %241 = vector.broadcast %1 : vector<8x1xf32> to vector<8x128xf32>
    %242 = arith.mulf %240, %241 : vector<8x128xf32>
    %c384 = arith.constant 384 : index
    %c0_62 = arith.constant 0 : index
    %243 = vector.load %arg4[%c384, %c0_62] : memref<1152x384xbf16, #tpu.memory_space<vmem>>, vector<128x384xbf16>
    %244 = arith.truncf %174 : vector<8x128xf32> to vector<8x128xbf16>
    %cst_63 = arith.constant dense<0.000000e+00> : vector<8x384xf32>
    %245 = tpu.matmul %244, %243, %cst_63 {dimension_numbers = #tpu.dot_dimension_numbers<[1], [0], [0], [1], [0, 0, 1, 1], [], []>} : vector<8x128xbf16>, vector<128x384xbf16>, vector<8x384xf32> -> vector<8x384xf32>
    %c104 = arith.constant 104 : index
    %c0_64 = arith.constant 0 : index
    %246 = vector.load %arg5[%c104, %c0_64] : memref<208x384xf32, #tpu.memory_space<vmem>>, vector<1x384xf32>
    %247 = vector.broadcast %246 : vector<1x384xf32> to vector<8x384xf32>
    %248 = arith.addf %245, %247 : vector<8x384xf32>
    %c512 = arith.constant 512 : index
    %c0_65 = arith.constant 0 : index
    %249 = vector.load %arg4[%c512, %c0_65] : memref<1152x384xbf16, #tpu.memory_space<vmem>>, vector<128x384xbf16>
    %250 = arith.truncf %242 : vector<8x128xf32> to vector<8x128xbf16>
    %cst_66 = arith.constant dense<0.000000e+00> : vector<8x384xf32>
    %251 = tpu.matmul %250, %249, %cst_66 {dimension_numbers = #tpu.dot_dimension_numbers<[1], [0], [0], [1], [0, 0, 1, 1], [], []>} : vector<8x128xbf16>, vector<128x384xbf16>, vector<8x384xf32> -> vector<8x384xf32>
    %c112 = arith.constant 112 : index
    %c0_67 = arith.constant 0 : index
    %252 = vector.load %arg5[%c112, %c0_67] : memref<208x384xf32, #tpu.memory_space<vmem>>, vector<1x384xf32>
    %253 = vector.broadcast %252 : vector<1x384xf32> to vector<8x384xf32>
    %254 = arith.addf %251, %253 : vector<8x384xf32>
    %255 = vector.extract_strided_slice %248 {offsets = [0, 0], sizes = [8, 128], strides = [1, 1]} : vector<8x384xf32> to vector<8x128xf32>
    %256 = vector.extract_strided_slice %254 {offsets = [0, 0], sizes = [8, 128], strides = [1, 1]} : vector<8x384xf32> to vector<8x128xf32>
    %257 = arith.addf %255, %256 : vector<8x128xf32>
    %258 = arith.negf %257 : vector<8x128xf32>
    %259 = math.exp %258 : vector<8x128xf32>
    %cst_68 = arith.constant 1.000000e+00 : f32
    %260 = vector.broadcast %cst_68 : f32 to vector<8x128xf32>
    %261 = arith.addf %260, %259 : vector<8x128xf32>
    %262 = arith.divf %260, %261 : vector<8x128xf32>
    %263 = vector.extract_strided_slice %248 {offsets = [0, 128], sizes = [8, 128], strides = [1, 1]} : vector<8x384xf32> to vector<8x128xf32>
    %264 = vector.extract_strided_slice %254 {offsets = [0, 128], sizes = [8, 128], strides = [1, 1]} : vector<8x384xf32> to vector<8x128xf32>
    %265 = arith.addf %263, %264 : vector<8x128xf32>
    %266 = arith.negf %265 : vector<8x128xf32>
    %267 = math.exp %266 : vector<8x128xf32>
    %cst_69 = arith.constant 1.000000e+00 : f32
    %268 = vector.broadcast %cst_69 : f32 to vector<8x128xf32>
    %269 = arith.addf %268, %267 : vector<8x128xf32>
    %270 = arith.divf %268, %269 : vector<8x128xf32>
    %271 = vector.extract_strided_slice %248 {offsets = [0, 256], sizes = [8, 128], strides = [1, 1]} : vector<8x384xf32> to vector<8x128xf32>
    %272 = vector.extract_strided_slice %254 {offsets = [0, 256], sizes = [8, 128], strides = [1, 1]} : vector<8x384xf32> to vector<8x128xf32>
    %273 = arith.mulf %262, %272 : vector<8x128xf32>
    %274 = arith.addf %271, %273 : vector<8x128xf32>
    %275 = math.tanh %274 : vector<8x128xf32>
    %cst_70 = arith.constant 1.000000e+00 : f32
    %276 = vector.broadcast %cst_70 : f32 to vector<8x128xf32>
    %277 = arith.subf %276, %270 : vector<8x128xf32>
    %278 = arith.mulf %277, %275 : vector<8x128xf32>
    %279 = arith.mulf %270, %242 : vector<8x128xf32>
    %280 = arith.addf %278, %279 : vector<8x128xf32>
    %c120 = arith.constant 120 : index
    %c0_71 = arith.constant 0 : index
    %281 = vector.load %arg5[%c120, %c0_71] : memref<208x384xf32, #tpu.memory_space<vmem>>, vector<1x128xf32>
    %c128_72 = arith.constant 128 : index
    %c0_73 = arith.constant 0 : index
    %282 = vector.load %arg5[%c128_72, %c0_73] : memref<208x384xf32, #tpu.memory_space<vmem>>, vector<1x128xf32>
    %283 = vector.broadcast %25 : vector<1x128xf32> to vector<8x128xf32>
    %284 = arith.mulf %280, %283 : vector<8x128xf32>
    %cst_74 = arith.constant dense<0.000000e+00> : vector<8xf32>
    %285 = vector.multi_reduction <add>, %284, %cst_74 [1] : vector<8x128xf32> to vector<8xf32>
    %286 = vector.shape_cast %285 : vector<8xf32> to vector<8x1xf32>
    %cst_75 = arith.constant 3.125000e-02 : f32
    %287 = vector.broadcast %cst_75 : f32 to vector<8x1xf32>
    %288 = arith.mulf %286, %287 : vector<8x1xf32>
    %289 = vector.broadcast %288 : vector<8x1xf32> to vector<8x128xf32>
    %290 = arith.subf %280, %289 : vector<8x128xf32>
    %291 = vector.broadcast %25 : vector<1x128xf32> to vector<8x128xf32>
    %292 = arith.mulf %290, %291 : vector<8x128xf32>
    %293 = arith.mulf %292, %292 : vector<8x128xf32>
    %cst_76 = arith.constant dense<0.000000e+00> : vector<8xf32>
    %294 = vector.multi_reduction <add>, %293, %cst_76 [1] : vector<8x128xf32> to vector<8xf32>
    %295 = vector.shape_cast %294 : vector<8xf32> to vector<8x1xf32>
    %cst_77 = arith.constant 3.125000e-02 : f32
    %296 = vector.broadcast %cst_77 : f32 to vector<8x1xf32>
    %297 = arith.mulf %295, %296 : vector<8x1xf32>
    %298 = vector.broadcast %288 : vector<8x1xf32> to vector<8x128xf32>
    %299 = arith.subf %280, %298 : vector<8x128xf32>
    %cst_78 = arith.constant 9.99999974E-6 : f32
    %300 = vector.broadcast %cst_78 : f32 to vector<8x1xf32>
    %301 = arith.addf %297, %300 : vector<8x1xf32>
    %302 = math.rsqrt %301 : vector<8x1xf32>
    %303 = vector.broadcast %302 : vector<8x1xf32> to vector<8x128xf32>
    %304 = arith.mulf %299, %303 : vector<8x128xf32>
    %305 = vector.broadcast %281 : vector<1x128xf32> to vector<8x128xf32>
    %306 = arith.mulf %304, %305 : vector<8x128xf32>
    %307 = vector.broadcast %282 : vector<1x128xf32> to vector<8x128xf32>
    %308 = arith.addf %306, %307 : vector<8x128xf32>
    %309 = tpu.concatenate %308, %239 in 1 : vector<8x128xf32>, vector<8x128xf32> -> vector<8x256xf32>
    %c136 = arith.constant 136 : index
    %c0_79 = arith.constant 0 : index
    %310 = vector.load %arg5[%c136, %c0_79] : memref<208x384xf32, #tpu.memory_space<vmem>>, vector<1x256xf32>
    %c144 = arith.constant 144 : index
    %c0_80 = arith.constant 0 : index
    %311 = vector.load %arg5[%c144, %c0_80] : memref<208x384xf32, #tpu.memory_space<vmem>>, vector<1x256xf32>
    %312 = vector.broadcast %42 : vector<1x256xf32> to vector<8x256xf32>
    %313 = arith.mulf %309, %312 : vector<8x256xf32>
    %cst_81 = arith.constant dense<0.000000e+00> : vector<8xf32>
    %314 = vector.multi_reduction <add>, %313, %cst_81 [1] : vector<8x256xf32> to vector<8xf32>
    %315 = vector.shape_cast %314 : vector<8xf32> to vector<8x1xf32>
    %cst_82 = arith.constant 1.562500e-02 : f32
    %316 = vector.broadcast %cst_82 : f32 to vector<8x1xf32>
    %317 = arith.mulf %315, %316 : vector<8x1xf32>
    %318 = vector.broadcast %317 : vector<8x1xf32> to vector<8x256xf32>
    %319 = arith.subf %309, %318 : vector<8x256xf32>
    %320 = vector.broadcast %42 : vector<1x256xf32> to vector<8x256xf32>
    %321 = arith.mulf %319, %320 : vector<8x256xf32>
    %322 = arith.mulf %321, %321 : vector<8x256xf32>
    %cst_83 = arith.constant dense<0.000000e+00> : vector<8xf32>
    %323 = vector.multi_reduction <add>, %322, %cst_83 [1] : vector<8x256xf32> to vector<8xf32>
    %324 = vector.shape_cast %323 : vector<8xf32> to vector<8x1xf32>
    %cst_84 = arith.constant 1.562500e-02 : f32
    %325 = vector.broadcast %cst_84 : f32 to vector<8x1xf32>
    %326 = arith.mulf %324, %325 : vector<8x1xf32>
    %327 = vector.broadcast %317 : vector<8x1xf32> to vector<8x256xf32>
    %328 = arith.subf %309, %327 : vector<8x256xf32>
    %cst_85 = arith.constant 9.99999974E-6 : f32
    %329 = vector.broadcast %cst_85 : f32 to vector<8x1xf32>
    %330 = arith.addf %326, %329 : vector<8x1xf32>
    %331 = math.rsqrt %330 : vector<8x1xf32>
    %332 = vector.broadcast %331 : vector<8x1xf32> to vector<8x256xf32>
    %333 = arith.mulf %328, %332 : vector<8x256xf32>
    %334 = vector.broadcast %310 : vector<1x256xf32> to vector<8x256xf32>
    %335 = arith.mulf %333, %334 : vector<8x256xf32>
    %336 = vector.broadcast %311 : vector<1x256xf32> to vector<8x256xf32>
    %337 = arith.addf %335, %336 : vector<8x256xf32>
    %c640 = arith.constant 640 : index
    %c0_86 = arith.constant 0 : index
    %338 = vector.load %arg4[%c640, %c0_86] : memref<1152x384xbf16, #tpu.memory_space<vmem>>, vector<256x128xbf16>
    %339 = arith.truncf %337 : vector<8x256xf32> to vector<8x256xbf16>
    %cst_87 = arith.constant dense<0.000000e+00> : vector<8x128xf32>
    %340 = tpu.matmul %339, %338, %cst_87 {dimension_numbers = #tpu.dot_dimension_numbers<[1], [0], [0], [1], [0, 0, 1, 1], [], []>} : vector<8x256xbf16>, vector<256x128xbf16>, vector<8x128xf32> -> vector<8x128xf32>
    %c152 = arith.constant 152 : index
    %c0_88 = arith.constant 0 : index
    %341 = vector.load %arg5[%c152, %c0_88] : memref<208x384xf32, #tpu.memory_space<vmem>>, vector<1x128xf32>
    %342 = vector.broadcast %341 : vector<1x128xf32> to vector<8x128xf32>
    %343 = arith.addf %340, %342 : vector<8x128xf32>
    %cst_89 = arith.constant 0.000000e+00 : f32
    %344 = vector.broadcast %cst_89 : f32 to vector<8x128xf32>
    %345 = arith.maximumf %343, %344 : vector<8x128xf32>
    %c160 = arith.constant 160 : index
    %c0_90 = arith.constant 0 : index
    %346 = vector.load %arg5[%c160, %c0_90] : memref<208x384xf32, #tpu.memory_space<vmem>>, vector<1x128xf32>
    %c168 = arith.constant 168 : index
    %c0_91 = arith.constant 0 : index
    %347 = vector.load %arg5[%c168, %c0_91] : memref<208x384xf32, #tpu.memory_space<vmem>>, vector<1x128xf32>
    %348 = vector.broadcast %25 : vector<1x128xf32> to vector<8x128xf32>
    %349 = arith.mulf %345, %348 : vector<8x128xf32>
    %cst_92 = arith.constant dense<0.000000e+00> : vector<8xf32>
    %350 = vector.multi_reduction <add>, %349, %cst_92 [1] : vector<8x128xf32> to vector<8xf32>
    %351 = vector.shape_cast %350 : vector<8xf32> to vector<8x1xf32>
    %cst_93 = arith.constant 3.125000e-02 : f32
    %352 = vector.broadcast %cst_93 : f32 to vector<8x1xf32>
    %353 = arith.mulf %351, %352 : vector<8x1xf32>
    %354 = vector.broadcast %353 : vector<8x1xf32> to vector<8x128xf32>
    %355 = arith.subf %345, %354 : vector<8x128xf32>
    %356 = vector.broadcast %25 : vector<1x128xf32> to vector<8x128xf32>
    %357 = arith.mulf %355, %356 : vector<8x128xf32>
    %358 = arith.mulf %357, %357 : vector<8x128xf32>
    %cst_94 = arith.constant dense<0.000000e+00> : vector<8xf32>
    %359 = vector.multi_reduction <add>, %358, %cst_94 [1] : vector<8x128xf32> to vector<8xf32>
    %360 = vector.shape_cast %359 : vector<8xf32> to vector<8x1xf32>
    %cst_95 = arith.constant 3.125000e-02 : f32
    %361 = vector.broadcast %cst_95 : f32 to vector<8x1xf32>
    %362 = arith.mulf %360, %361 : vector<8x1xf32>
    %363 = vector.broadcast %353 : vector<8x1xf32> to vector<8x128xf32>
    %364 = arith.subf %345, %363 : vector<8x128xf32>
    %cst_96 = arith.constant 9.99999974E-6 : f32
    %365 = vector.broadcast %cst_96 : f32 to vector<8x1xf32>
    %366 = arith.addf %362, %365 : vector<8x1xf32>
    %367 = math.rsqrt %366 : vector<8x1xf32>
    %368 = vector.broadcast %367 : vector<8x1xf32> to vector<8x128xf32>
    %369 = arith.mulf %364, %368 : vector<8x128xf32>
    %370 = vector.broadcast %346 : vector<1x128xf32> to vector<8x128xf32>
    %371 = arith.mulf %369, %370 : vector<8x128xf32>
    %372 = vector.broadcast %347 : vector<1x128xf32> to vector<8x128xf32>
    %373 = arith.addf %371, %372 : vector<8x128xf32>
    %c896 = arith.constant 896 : index
    %c0_97 = arith.constant 0 : index
    %374 = vector.load %arg4[%c896, %c0_97] : memref<1152x384xbf16, #tpu.memory_space<vmem>>, vector<128x128xbf16>
    %375 = arith.truncf %373 : vector<8x128xf32> to vector<8x128xbf16>
    %cst_98 = arith.constant dense<0.000000e+00> : vector<8x128xf32>
    %376 = tpu.matmul %375, %374, %cst_98 {dimension_numbers = #tpu.dot_dimension_numbers<[1], [0], [0], [1], [0, 0, 1, 1], [], []>} : vector<8x128xbf16>, vector<128x128xbf16>, vector<8x128xf32> -> vector<8x128xf32>
    %c176 = arith.constant 176 : index
    %c0_99 = arith.constant 0 : index
    %377 = vector.load %arg5[%c176, %c0_99] : memref<208x384xf32, #tpu.memory_space<vmem>>, vector<1x128xf32>
    %378 = vector.broadcast %377 : vector<1x128xf32> to vector<8x128xf32>
    %379 = arith.addf %376, %378 : vector<8x128xf32>
    %cst_100 = arith.constant 0.000000e+00 : f32
    %380 = vector.broadcast %cst_100 : f32 to vector<8x128xf32>
    %381 = arith.maximumf %379, %380 : vector<8x128xf32>
    %c184 = arith.constant 184 : index
    %c0_101 = arith.constant 0 : index
    %382 = vector.load %arg5[%c184, %c0_101] : memref<208x384xf32, #tpu.memory_space<vmem>>, vector<1x128xf32>
    %c192 = arith.constant 192 : index
    %c0_102 = arith.constant 0 : index
    %383 = vector.load %arg5[%c192, %c0_102] : memref<208x384xf32, #tpu.memory_space<vmem>>, vector<1x128xf32>
    %384 = vector.broadcast %25 : vector<1x128xf32> to vector<8x128xf32>
    %385 = arith.mulf %381, %384 : vector<8x128xf32>
    %cst_103 = arith.constant dense<0.000000e+00> : vector<8xf32>
    %386 = vector.multi_reduction <add>, %385, %cst_103 [1] : vector<8x128xf32> to vector<8xf32>
    %387 = vector.shape_cast %386 : vector<8xf32> to vector<8x1xf32>
    %cst_104 = arith.constant 3.125000e-02 : f32
    %388 = vector.broadcast %cst_104 : f32 to vector<8x1xf32>
    %389 = arith.mulf %387, %388 : vector<8x1xf32>
    %390 = vector.broadcast %389 : vector<8x1xf32> to vector<8x128xf32>
    %391 = arith.subf %381, %390 : vector<8x128xf32>
    %392 = vector.broadcast %25 : vector<1x128xf32> to vector<8x128xf32>
    %393 = arith.mulf %391, %392 : vector<8x128xf32>
    %394 = arith.mulf %393, %393 : vector<8x128xf32>
    %cst_105 = arith.constant dense<0.000000e+00> : vector<8xf32>
    %395 = vector.multi_reduction <add>, %394, %cst_105 [1] : vector<8x128xf32> to vector<8xf32>
    %396 = vector.shape_cast %395 : vector<8xf32> to vector<8x1xf32>
    %cst_106 = arith.constant 3.125000e-02 : f32
    %397 = vector.broadcast %cst_106 : f32 to vector<8x1xf32>
    %398 = arith.mulf %396, %397 : vector<8x1xf32>
    %399 = vector.broadcast %389 : vector<8x1xf32> to vector<8x128xf32>
    %400 = arith.subf %381, %399 : vector<8x128xf32>
    %cst_107 = arith.constant 9.99999974E-6 : f32
    %401 = vector.broadcast %cst_107 : f32 to vector<8x1xf32>
    %402 = arith.addf %398, %401 : vector<8x1xf32>
    %403 = math.rsqrt %402 : vector<8x1xf32>
    %404 = vector.broadcast %403 : vector<8x1xf32> to vector<8x128xf32>
    %405 = arith.mulf %400, %404 : vector<8x128xf32>
    %406 = vector.broadcast %382 : vector<1x128xf32> to vector<8x128xf32>
    %407 = arith.mulf %405, %406 : vector<8x128xf32>
    %408 = vector.broadcast %383 : vector<1x128xf32> to vector<8x128xf32>
    %409 = arith.addf %407, %408 : vector<8x128xf32>
    %c1024 = arith.constant 1024 : index
    %c0_108 = arith.constant 0 : index
    %410 = vector.load %arg4[%c1024, %c0_108] : memref<1152x384xbf16, #tpu.memory_space<vmem>>, vector<128x128xbf16>
    %411 = arith.truncf %409 : vector<8x128xf32> to vector<8x128xbf16>
    %cst_109 = arith.constant dense<0.000000e+00> : vector<8x128xf32>
    %412 = tpu.matmul %411, %410, %cst_109 {dimension_numbers = #tpu.dot_dimension_numbers<[1], [0], [0], [1], [0, 0, 1, 1], [], []>} : vector<8x128xbf16>, vector<128x128xbf16>, vector<8x128xf32> -> vector<8x128xf32>
    %c200 = arith.constant 200 : index
    %c0_110 = arith.constant 0 : index
    %413 = vector.load %arg5[%c200, %c0_110] : memref<208x384xf32, #tpu.memory_space<vmem>>, vector<1x128xf32>
    %414 = vector.broadcast %413 : vector<1x128xf32> to vector<8x128xf32>
    %415 = arith.addf %412, %414 : vector<8x128xf32>
    %416 = tpu.iota {dimensions = array<i32: 1>} : vector<8x128xi32>
    %c5_i32 = arith.constant 5 : i32
    %417 = vector.broadcast %c5_i32 : i32 to vector<8x128xi32>
    %418 = arith.cmpi slt, %416, %417 : vector<8x128xi32>
    %cst_111 = arith.constant -1.000000e+30 : f32
    %419 = vector.broadcast %cst_111 : f32 to vector<8x128xf32>
    %420 = arith.select %418, %415, %419 : vector<8x128xi1>, vector<8x128xf32>
    %cst_112 = arith.constant dense<0xFF800000> : vector<8xf32>
    %421 = vector.multi_reduction <maximumf>, %420, %cst_112 [1] : vector<8x128xf32> to vector<8xf32>
    %422 = vector.shape_cast %421 : vector<8xf32> to vector<8x1xf32>
    %423 = vector.broadcast %422 : vector<8x1xf32> to vector<8x128xf32>
    %424 = arith.subf %420, %423 : vector<8x128xf32>
    %425 = math.exp %424 : vector<8x128xf32>
    %cst_113 = arith.constant dense<0.000000e+00> : vector<8xf32>
    %426 = vector.multi_reduction <add>, %425, %cst_113 [1] : vector<8x128xf32> to vector<8xf32>
    %427 = vector.shape_cast %426 : vector<8xf32> to vector<8x1xf32>
    %428 = math.log %427 : vector<8x1xf32>
    %429 = arith.addf %422, %428 : vector<8x1xf32>
    %430 = arith.subf %422, %429 : vector<8x1xf32>
    %431 = vector.broadcast %422 : vector<8x1xf32> to vector<8x128xf32>
    %432 = arith.cmpf oge, %420, %431 : vector<8x128xf32>
    %c128_i32_114 = arith.constant 128 : i32
    %433 = vector.broadcast %c128_i32_114 : i32 to vector<8x128xi32>
    %434 = arith.select %432, %416, %433 : vector<8x128xi1>, vector<8x128xi32>
    %cst_115 = arith.constant dense<2147483647> : vector<8xi32>
    %435 = vector.multi_reduction <minsi>, %434, %cst_115 [1] : vector<8x128xi32> to vector<8xi32>
    %436 = vector.shape_cast %435 : vector<8xi32> to vector<8x1xi32>
    %c0_116 = arith.constant 0 : index
    %c0_117 = arith.constant 0 : index
    %437 = vector.load %arg7[%c0_116, %c0_117] : memref<8x128xf32, #tpu.memory_space<vmem>>, vector<8x128xf32>
    tpu.vector_store %arg7[%c0_116, %c0_117], %280 {strides = array<i32>} : memref<8x128xf32, #tpu.memory_space<vmem>>, vector<8x128xf32>,
    %438 = tpu.iota {dimensions = array<i32: 1>} : vector<8x128xi32>
    %c0_i32_118 = arith.constant 0 : i32
    %439 = vector.broadcast %c0_i32_118 : i32 to vector<8x128xi32>
    %440 = arith.cmpi eq, %438, %439 : vector<8x128xi32>
    %441 = arith.sitofp %436 : vector<8x1xi32> to vector<8x1xf32>
    %c1_i32 = arith.constant 1 : i32
    %442 = vector.broadcast %c1_i32 : i32 to vector<8x128xi32>
    %443 = arith.cmpi eq, %438, %442 : vector<8x128xi32>
    %cst_119 = arith.constant 0.000000e+00 : f32
    %444 = vector.shape_cast %430 : vector<8x1xf32> to vector<8x1xf32>
    %445 = vector.broadcast %444 : vector<8x1xf32> to vector<8x128xf32>
    %446 = vector.broadcast %cst_119 : f32 to vector<8x128xf32>
    %447 = arith.select %443, %445, %446 : vector<8x128xi1>, vector<8x128xf32>
    %448 = vector.shape_cast %441 : vector<8x1xf32> to vector<8x1xf32>
    %449 = vector.broadcast %448 : vector<8x1xf32> to vector<8x128xf32>
    %450 = arith.select %440, %449, %447 : vector<8x128xi1>, vector<8x128xf32>
    %c0_120 = arith.constant 0 : index
    %c0_121 = arith.constant 0 : index
    %451 = vector.load %arg6[%c0_120, %c0_121] : memref<8x128xf32, #tpu.memory_space<vmem>>, vector<8x128xf32>
    tpu.vector_store %arg6[%c0_120, %c0_121], %450 {strides = array<i32>} : memref<8x128xf32, #tpu.memory_space<vmem>>, vector<8x128xf32>,
    return
  }
  func.func @transform_0(%arg0: i32) -> (i32, i32) {
    %c0_i32 = arith.constant 0 : i32
    %c0_i32_0 = arith.constant 0 : i32
    return %arg0, %c0_i32 : i32, i32
  }
  func.func @transform_1(%arg0: i32) -> (i32, i32) {
    %c0_i32 = arith.constant 0 : i32
    %c0_i32_0 = arith.constant 0 : i32
    return %arg0, %c0_i32 : i32, i32
  }
  func.func @transform_2(%arg0: i32) -> (i32, i32) {
    %c0_i32 = arith.constant 0 : i32
    %c0_i32_0 = arith.constant 0 : i32
    return %arg0, %c0_i32 : i32, i32
  }
  func.func @transform_3(%arg0: i32) -> (i32, i32) {
    %c0_i32 = arith.constant 0 : i32
    %c0_i32_0 = arith.constant 0 : i32
    %c0_i32_1 = arith.constant 0 : i32
    return %c0_i32, %c0_i32_0 : i32, i32
  }
  func.func @transform_4(%arg0: i32) -> (i32, i32) {
    %c0_i32 = arith.constant 0 : i32
    %c0_i32_0 = arith.constant 0 : i32
    %c0_i32_1 = arith.constant 0 : i32
    return %c0_i32, %c0_i32_0 : i32, i32
  }
  func.func @transform_5(%arg0: i32) -> (i32, i32) {
    %c0_i32 = arith.constant 0 : i32
    %c0_i32_0 = arith.constant 0 : i32
    return %arg0, %c0_i32 : i32, i32
  }
  func.func @transform_6(%arg0: i32) -> (i32, i32) {
    %c0_i32 = arith.constant 0 : i32
    %c0_i32_0 = arith.constant 0 : i32
    return %arg0, %c0_i32 : i32, i32
  }
}

</mosaic_0001>

<llo_original>
// kernel: run.1
$region0: #{run.1}
  #allocation0 [shape = 'u32[]', space=smem, size = 0x4, offset = 0x4, fixed_abs, tag = 'smem constant byte address 0x4 - core index']
  #allocation1 [shape = 'u32[144,128]{1,0:T(1,128)}', space=vmem, size = 0x12000, scoped, tag = 'internal scratch']
  %s0 = inlined_call_operand.vmem [shape: f32[8,128], index: 0, kind: input, shape index: {}]
  %s1 = inlined_call_operand.vmem [shape: f32[8,128], index: 1, kind: input, shape index: {}, may-alias: {1,6}]
  %s2 = inlined_call_operand.vmem [shape: f32[8,1], index: 2, kind: input, shape index: {}]
  %s3 = inlined_call_operand.hbm [shape: bf16[1152,384], index: 3, kind: input, shape index: {}]
  %s4 = inlined_call_operand.hbm [shape: f32[208,384], index: 4, kind: input, shape index: {}]
  %s5 = inlined_call_operand.vmem [shape: f32[8,128], index: 5, kind: output, shape index: {0}]
  %s6 = inlined_call_operand.vmem [shape: f32[8,128], index: 6, kind: output, shape index: {1}, may-alias: {1,6}]
  %7 = xla_tuple %s5, %s6
  %s8 = sld [smem:[#allocation0]]
  $region46: #{run.1} parent=0
    _
  %s10 = ssub.s32 1, %s8
  %s11 = scalar_select 0, %s10, %s8
  $region1: #{run.1} parent=0
    #allocation2 [shape = 'u8[884736]{0}', space=vmem, size = 0xd8000, scoped, tag = 'input window, operand 3, single buffered']
    #allocation3 [shape = 's32[1]{0}', space=sflag, size = 0x4, scoped, tag = 'scoped memory for run.1']
    #allocation4 [shape = 'u8[319488]{0}', space=vmem, size = 0x4e000, scoped, tag = 'input window, operand 4, single buffered']
    #allocation5 [shape = 's32[1]{0}', space=sflag, size = 0x4, scoped, tag = 'scoped memory for run.1']
    %12 = vsyncpa [#allocation3], 0
    %13 = vsyncpa [#allocation5], 0
    // Predicated region
    $region2: #{run.1} parent=1 // pred_check
      _
    $region3: #{run.1} parent=1 // pred_check_branch
      %15 = sbr.rel (0) target = $region5
    $region4: #{run.1} parent=1 // pred_region
      _
    $region5: #{run.1} parent=1 // pred_fallthru
      _
    // Predicated region
    $region6: #{run.1} parent=1 // pred_check
      _
    $region7: #{run.1} parent=1 // pred_check_branch
      %17 = sbr.rel (0) target = $region9
    $region8: #{run.1} parent=1 // pred_region
      _
    $region9: #{run.1} parent=1 // pred_fallthru
      _
    // Predicated region
    $region10: #{run.1} parent=1 // pred_check
      _
    $region11: #{run.1} parent=1 // pred_check_branch
      %19 = sbr.rel (0) target = $region13
    $region12: #{run.1} parent=1 // pred_region
      _
    $region13: #{run.1} parent=1 // pred_fallthru
      _
    // Predicated region
    $region14: #{run.1} parent=1 // pred_check
      _
    $region15: #{run.1} parent=1 // pred_check_branch
      %21 = sbr.rel (0) target = $region17
    $region16: #{run.1} parent=1 // pred_region
      %s23 = ssub.s32 27648, 27648
      %24 = vsyncadd [#allocation3], %s23
      %s25 = sshll.u32 [#allocation2], 4
      %s26 = int_to_ptr.vmem [resolvable:$true] %s25
      %31 = dma.hbm_to_vmem [thread:$0]  %s3, 27648, %s26, [#allocation3], 192, 192, 12
    $region17: #{run.1} parent=1 // pred_fallthru
      _
    // Predicated region
    $region18: #{run.1} parent=1 // pred_check
      _
    $region19: #{run.1} parent=1 // pred_check_branch
      %33 = sbr.rel (0) target = $region21
    $region20: #{run.1} parent=1 // pred_region
      %s35 = ssub.s32 9984, 9984
      %36 = vsyncadd [#allocation5], %s35
      %s37 = sshll.u32 [#allocation4], 4
      %s38 = int_to_ptr.vmem [resolvable:$true] %s37
      %43 = dma.hbm_to_vmem [thread:$0]  %s4, 9984, %s38, [#allocation5], 384, 384, 24
    $region21: #{run.1} parent=1 // pred_fallthru
      _
    // Predicated region
    $region22: #{run.1} parent=1 // pred_check
      _
    $region23: #{run.1} parent=1 // pred_check_branch
      %45 = sbr.rel (0) target = $region25
    $region24: #{run.1} parent=1 // pred_region
      %46 = dma.done [#allocation3], 27648
    $region25: #{run.1} parent=1 // pred_fallthru
      _
    // Predicated region
    $region26: #{run.1} parent=1 // pred_check
      _
    $region27: #{run.1} parent=1 // pred_check_branch
      %48 = sbr.rel (0) target = $region29
    $region28: #{run.1} parent=1 // pred_region
      %49 = dma.done [#allocation5], 9984
    $region29: #{run.1} parent=1 // pred_fallthru
      _
    %v51 = vld [vmem:[%s0] sm:$0xff]
    %v52 = vld [vmem:[%s2] sm:$0xff]
    %v53 = vlaneseq
    %v54 = vand.u32 %v53, 127
    %vm55 = vcmp.ge.s32.totalorder %v54, 0
    %vm56 = vcmp.lt.s32.totalorder %v54, 4
    %vm57 = vmand %vm55, %vm56
    %v58 = vsel %vm57, 1, 0
    %v59 = vcvt.s32.f32 %v58
    %vm60 = vcmp.ge.s32.totalorder %v54, 4
    %vm61 = vcmp.lt.s32.totalorder %v54, 20
    %vm62 = vmand %vm60, %vm61
    %v63 = vsel %vm62, 1, 0
    %v64 = vcvt.s32.f32 %v63
    %vm65 = vcmp.lt.s32.totalorder %v54, 32
    %vm66 = vmand %vm55, %vm65
    %v67 = vsel %vm66, 1, 0
    %v68 = vcvt.s32.f32 %v67
    %v69 = vadd.s32 %v54, 128
    %vm70 = vcmp.ge.s32.totalorder %v69, 0
    %vm71 = vcmp.lt.s32.totalorder %v69, 32
    %vm72 = vmand %vm70, %vm71
    %v73 = vsel %vm72, 1, 0
    %v74 = vcvt.s32.f32 %v73
    %vm75 = vcmp.ge.s32.totalorder %v54, 128
    %vm76 = vcmp.ge.s32.totalorder %v69, 128
    %vm77 = vcmp.lt.s32.totalorder %v54, 160
    %vm78 = vcmp.lt.s32.totalorder %v69, 160
    %vm79 = vmand %vm75, %vm77
    %vm80 = vmand %vm76, %vm78
    %v81 = vsel %vm79, 1, 0
    %v82 = vsel %vm80, 1, 0
    %v83 = vcvt.s32.f32 %v81
    %v84 = vcvt.s32.f32 %v82
    %v85 = vadd.f32 %v68, %v83
    %v86 = vadd.f32 %v74, %v84
    %v87 = vld [vmem:[#allocation4] ss:$0 sm:$0xff]
    %v88 = vld [vmem:[#allocation4 + $0x18] ss:$0 sm:$0xff]
    %v89 = vmul.f32 %v51, %v59
    %90 = vadd.xlane.f32.xlu0 %v89
    %v91 = vpop.xlane.xlu0 %90
    %v92 = vmul.f32 %v91, 0.25
    %v93 = vsub.f32 %v51, %v92
    %v94 = vmul.f32 %v93, %v59
    %v95 = vmul.f32 %v94, %v94
    %96 = vadd.xlane.f32.xlu0 %v95
    %v97 = vpop.xlane.xlu0 %96
    %v98 = vmul.f32 %v97, 0.25
    %v99 = vadd.f32 %v98, 1e-05
    %v100 = vrsqrt.pop %v99
    %v101 = vmul.f32 %v93, %v100
    %v102 = vmul.f32 %v101, %v87
    %v103 = vadd.f32 %v102, %v88
    %v104 = vmul.f32 %v51, %v64
    %105 = vadd.xlane.f32.xlu0 %v104
    %v106 = vpop.xlane.xlu0 %105
    %v107 = vmul.f32 %v106, 0.0625
    %v108 = vsub.f32 %v51, %v107
    %v109 = vmul.f32 %v108, %v64
    %v110 = vmul.f32 %v109, %v109
    %111 = vadd.xlane.f32.xlu0 %v110
    %v112 = vpop.xlane.xlu0 %111
    %v113 = vmul.f32 %v112, 0.0625
    %v114 = vadd.f32 %v113, 1e-05
    %v115 = vrsqrt.pop %v114
    %v116 = vmul.f32 %v108, %v115
    %v117 = vmul.f32 %v116, %v87
    %v118 = vadd.f32 %v117, %v88
    %v119 = vmul.f32 %v103, %v59
    %v120 = vmul.f32 %v118, %v64
    %v121 = vadd.f32 %v119, %v120
    %v122 = vld [vmem:[#allocation2] sm:$0xff]
    %v123 = vld [vmem:[#allocation2 + $0xc] sm:$0xff]
    %v124 = vld [vmem:[#allocation2 + $0x18] sm:$0xff]
    %v125 = vld [vmem:[#allocation2 + $0x24] sm:$0xff]
    %v126 = vld [vmem:[#allocation2 + $0x30] sm:$0xff]
    %v127 = vld [vmem:[#allocation2 + $0x3c] sm:$0xff]
    %v128 = vld [vmem:[#allocation2 + $0x48] sm:$0xff]
    %v129 = vld [vmem:[#allocation2 + $0x54] sm:$0xff]
    %v130 = vld [vmem:[#allocation2 + $0x60] sm:$0xff]
    %v131 = vld [vmem:[#allocation2 + $0x6c] sm:$0xff]
    %v132 = vld [vmem:[#allocation2 + $0x78] sm:$0xff]
    %v133 = vld [vmem:[#allocation2 + $0x84] sm:$0xff]
    %v134 = vld [vmem:[#allocation2 + $0x90] sm:$0xff]
    %v135 = vld [vmem:[#allocation2 + $0x9c] sm:$0xff]
    %v136 = vld [vmem:[#allocation2 + $0xa8] sm:$0xff]
    %v137 = vld [vmem:[#allocation2 + $0xb4] sm:$0xff]
    %v138 = vpack.c.bf16 %v121, %v121
    %s139 = scalar_lea.vmem [#allocation4], 48
    %v140 = vld [vmem:[%s139] ss:$8 sm:$0x3]
    %v142 = vlaneseq
    %v143 = vshrl.u32 %v142, 7
    %v144 = vsub.s32 0, %v143
    %v145 = vrot.slane %v140, %v144
    %v146 = vlaneseq
    %v147 = vshrl.u32 %v146, 7
    %v148 = vsub.s32 1, %v147
    %v149 = vrot.slane %v140, %v148
    %v168 = vunpack.c.l.b16 %v122
    %v169 = vunpack.c.h.b16 %v122
    %v170 = vunpack.c.l.b16 %v123
    %v171 = vunpack.c.h.b16 %v123
    %v172 = vunpack.c.l.b16 %v124
    %v173 = vunpack.c.h.b16 %v124
    %v174 = vunpack.c.l.b16 %v125
    %v175 = vunpack.c.h.b16 %v125
    %v176 = vunpack.c.l.b16 %v126
    %v177 = vunpack.c.h.b16 %v126
    %v178 = vunpack.c.l.b16 %v127
    %v179 = vunpack.c.h.b16 %v127
    %v180 = vunpack.c.l.b16 %v128
    %v181 = vunpack.c.h.b16 %v128
    %v182 = vunpack.c.l.b16 %v129
    %v183 = vunpack.c.h.b16 %v129
    %v184 = vunpack.c.l.b16 %v130
    %v185 = vunpack.c.h.b16 %v130
    %v186 = vunpack.c.l.b16 %v131
    %v187 = vunpack.c.h.b16 %v131
    %v188 = vunpack.c.l.b16 %v132
    %v189 = vunpack.c.h.b16 %v132
    %v190 = vunpack.c.l.b16 %v133
    %v191 = vunpack.c.h.b16 %v133
    %v192 = vunpack.c.l.b16 %v134
    %v193 = vunpack.c.h.b16 %v134
    %v194 = vunpack.c.l.b16 %v135
    %v195 = vunpack.c.h.b16 %v135
    %v196 = vunpack.c.l.b16 %v136
    %v197 = vunpack.c.h.b16 %v136
    %v198 = vunpack.c.l.b16 %v137
    %v199 = vunpack.c.h.b16 %v137
    %v200 = vpack.c.b16 %v170, %v168
    %v201 = vpack.c.b16 %v171, %v169
    %v202 = vpack.c.b16 %v174, %v172
    %v203 = vpack.c.b16 %v175, %v173
    %v204 = vpack.c.b16 %v178, %v176
    %v205 = vpack.c.b16 %v179, %v177
    %v206 = vpack.c.b16 %v182, %v180
    %v207 = vpack.c.b16 %v183, %v181
    %v208 = vpack.c.b16 %v186, %v184
    %v209 = vpack.c.b16 %v187, %v185
    %v210 = vpack.c.b16 %v190, %v188
    %v211 = vpack.c.b16 %v191, %v189
    %v212 = vpack.c.b16 %v194, %v192
    %v213 = vpack.c.b16 %v195, %v193
    %v214 = vpack.c.b16 %v198, %v196
    %v215 = vpack.c.b16 %v199, %v197
    %232 = vmatprep.subr.bf16.mxu0 %v215
    %233 = vmatpush1.bf16.msra.mxu0 %v214
    %234 = vmatprep.subr.bf16.mxu0 %v213
    %235 = vmatpush1.bf16.msra.mxu0 %v212
    %236 = vmatprep.subr.bf16.mxu0 %v211
    %237 = vmatpush1.bf16.msra.mxu0 %v210
    %238 = vmatprep.subr.bf16.mxu0 %v209
    %239 = vmatpush1.bf16.msra.mxu0 %v208
    %240 = vmatprep.subr.bf16.mxu0 %v207
    %241 = vmatpush1.bf16.msra.mxu0 %v206
    %242 = vmatprep.subr.bf16.mxu0 %v205
    %243 = vmatpush1.bf16.msra.mxu0 %v204
    %244 = vmatprep.subr.bf16.mxu0 %v203
    %245 = vmatpush1.bf16.msra.mxu0 %v202
    %246 = vmatprep.subr.bf16.mxu0 %v201
    %247 = vmatpush1.bf16.msra.mxu0 %v200
    %248 = vmatprep.subr.bf16.mxu0 0
    %249 = vmatpush2.bf16.msra.mxu0 0
    %250 = vmatprep.subr.bf16.mxu0 0
    %251 = vmatpush2.bf16.msra.mxu0 0
    %252 = vmatprep.subr.bf16.mxu0 0
    %253 = vmatpush2.bf16.msra.mxu0 0
    %254 = vmatprep.subr.bf16.mxu0 0
    %255 = vmatpush2.bf16.msra.mxu0 0
    %256 = vmatprep.subr.bf16.mxu0 0
    %257 = vmatpush2.bf16.msra.mxu0 0
    %258 = vmatprep.subr.bf16.mxu0 0
    %259 = vmatpush2.bf16.msra.mxu0 0
    %260 = vmatprep.subr.bf16.mxu0 0
    %261 = vmatpush2.bf16.msra.mxu0 0
    %262 = vmatprep.subr.bf16.mxu0 0
    %263 = vmatpush2.bf16.msra.mxu0 0
    %264 = vmatprep.mubr.bf16.mxu0 0
    %265 = vmatmul.mubr.bf16.gmra.mxu0 %v138
    %v266 = vpop.f32.mrf.mxu0
    %v267 = vadd.f32 %v145, %v266
    %v268 = vpop.f32.mrf.mxu0
    %v269 = vadd.f32 %v149, %v268
    %v270 = vpop.f32.mrf.mxu0
    %v271 = vpop.f32.mrf.mxu0
    %272 = vdwg.mxu0
    %v273 = vmax.f32 %v267, 0.0
    %v274 = vmax.f32 %v269, 0.0
    %v275 = vld [vmem:[#allocation4 + $0x48] ss:$0 sm:$0xff]
    %v276 = vld [vmem:[#allocation4 + $0x60] ss:$0 sm:$0xff]
    %v277 = vmul.f32 %v273, %v68
    %278 = vadd.xlane.f32.xlu0 %v277
    %v279 = vpop.xlane.xlu0 %278
    %v280 = vmul.f32 %v279, 0.03125
    %v281 = vsub.f32 %v273, %v280
    %v282 = vmul.f32 %v281, %v68
    %v283 = vmul.f32 %v282, %v282
    %284 = vadd.xlane.f32.xlu0 %v283
    %v285 = vpop.xlane.xlu0 %284
    %v286 = vmul.f32 %v285, 0.03125
    %v287 = vadd.f32 %v286, 1e-05
    %v288 = vrsqrt.pop %v287
    %v289 = vmul.f32 %v281, %v288
    %v290 = vmul.f32 %v289, %v275
    %v291 = vadd.f32 %v290, %v276
    %v292 = vld [vmem:[#allocation2 + $0xc0] sm:$0xf]
    %v293 = vld [vmem:[#allocation2 + $0xcc] sm:$0xf]
    %v294 = vld [vmem:[#allocation2 + $0xd8] sm:$0xf]
    %v295 = vld [vmem:[#allocation2 + $0xe4] sm:$0xf]
    %v296 = vld [vmem:[#allocation2 + $0xf0] sm:$0xf]
    %v297 = vld [vmem:[#allocation2 + $0xfc] sm:$0xf]
    %v298 = vld [vmem:[#allocation2 + $0x108] sm:$0xf]
    %v299 = vld [vmem:[#allocation2 + $0x114] sm:$0xf]
    %v300 = vld [vmem:[#allocation2 + $0x120] sm:$0xf]
    %v301 = vld [vmem:[#allocation2 + $0x12c] sm:$0xf]
    %v302 = vld [vmem:[#allocation2 + $0x138] sm:$0xf]
    %v303 = vld [vmem:[#allocation2 + $0x144] sm:$0xf]
    %v304 = vld [vmem:[#allocation2 + $0x150] sm:$0xf]
    %v305 = vld [vmem:[#allocation2 + $0x15c] sm:$0xf]
    %v306 = vld [vmem:[#allocation2 + $0x168] sm:$0xf]
    %v307 = vld [vmem:[#allocation2 + $0x174] sm:$0xf]
    %v308 = vpack.c.bf16 %v291, %v291
    %v309 = vld [vmem:[#allocation4 + $0x78] ss:$0 sm:$0xff]
    %v326 = vunpack.c.l.b16 %v292
    %v327 = vunpack.c.l.b16 %v293
    %v328 = vunpack.c.l.b16 %v294
    %v329 = vunpack.c.l.b16 %v295
    %v330 = vunpack.c.l.b16 %v296
    %v331 = vunpack.c.l.b16 %v297
    %v332 = vunpack.c.l.b16 %v298
    %v333 = vunpack.c.l.b16 %v299
    %v334 = vunpack.c.l.b16 %v300
    %v335 = vunpack.c.l.b16 %v301
    %v336 = vunpack.c.l.b16 %v302
    %v337 = vunpack.c.l.b16 %v303
    %v338 = vunpack.c.l.b16 %v304
    %v339 = vunpack.c.l.b16 %v305
    %v340 = vunpack.c.l.b16 %v306
    %v341 = vunpack.c.l.b16 %v307
    %v342 = vpack.c.b16 %v327, %v326
    %v343 = vpack.c.b16 %v329, %v328
    %v344 = vpack.c.b16 %v331, %v330
    %v345 = vpack.c.b16 %v333, %v332
    %v346 = vpack.c.b16 %v335, %v334
    %v347 = vpack.c.b16 %v337, %v336
    %v348 = vpack.c.b16 %v339, %v338
    %v349 = vpack.c.b16 %v341, %v340
    %358 = vmatprep.subr.bf16.mxu0 0
    %359 = vmatpush1.bf16.msra.mxu0 %v349
    %360 = vmatprep.subr.bf16.mxu0 0
    %361 = vmatpush1.bf16.msra.mxu0 %v348
    %362 = vmatprep.subr.bf16.mxu0 0
    %363 = vmatpush1.bf16.msra.mxu0 %v347
    %364 = vmatprep.subr.bf16.mxu0 0
    %365 = vmatpush1.bf16.msra.mxu0 %v346
    %366 = vmatprep.subr.bf16.mxu0 0
    %367 = vmatpush1.bf16.msra.mxu0 %v345
    %368 = vmatprep.subr.bf16.mxu0 0
    %369 = vmatpush1.bf16.msra.mxu0 %v344
    %370 = vmatprep.subr.bf16.mxu0 0
    %371 = vmatpush1.bf16.msra.mxu0 %v343
    %372 = vmatprep.subr.bf16.mxu0 0
    %373 = vmatpush1.bf16.msra.mxu0 %v342
    %374 = vmatprep.subr.bf16.mxu0 0
    %375 = vmatpush2.bf16.msra.mxu0 0
    %376 = vmatprep.subr.bf16.mxu0 0
    %377 = vmatpush2.bf16.msra.mxu0 0
    %378 = vmatprep.subr.bf16.mxu0 0
    %379 = vmatpush2.bf16.msra.mxu0 0
    %380 = vmatprep.subr.bf16.mxu0 0
    %381 = vmatpush2.bf16.msra.mxu0 0
    %382 = vmatprep.subr.bf16.mxu0 0
    %383 = vmatpush2.bf16.msra.mxu0 0
    %384 = vmatprep.subr.bf16.mxu0 0
    %385 = vmatpush2.bf16.msra.mxu0 0
    %386 = vmatprep.subr.bf16.mxu0 0
    %387 = vmatpush2.bf16.msra.mxu0 0
    %388 = vmatprep.subr.bf16.mxu0 0
    %389 = vmatpush2.bf16.msra.mxu0 0
    %390 = vmatprep.mubr.bf16.mxu0 0
    %391 = vmatmul.mubr.bf16.gmra.mxu0 %v308
    %v392 = vpop.f32.mrf.mxu0
    %v393 = vadd.f32 %v309, %v392
    %v394 = vpop.f32.mrf.mxu0
    %v395 = vpop.f32.mrf.mxu0
    %v396 = vpop.f32.mrf.mxu0
    %397 = vdwg.mxu0
    %v398 = vmax.f32 %v393, 0.0
    %v399 = vld [vmem:[#allocation4 + $0x90] ss:$0 sm:$0xff]
    %v400 = vld [vmem:[#allocation4 + $0xa8] ss:$0 sm:$0xff]
    %v401 = vmul.f32 %v398, %v68
    %402 = vadd.xlane.f32.xlu0 %v401
    %v403 = vpop.xlane.xlu0 %402
    %v404 = vmul.f32 %v403, 0.03125
    %v405 = vsub.f32 %v398, %v404
    %v406 = vmul.f32 %v405, %v68
    %v407 = vmul.f32 %v406, %v406
    %408 = vadd.xlane.f32.xlu0 %v407
    %v409 = vpop.xlane.xlu0 %408
    %v410 = vmul.f32 %v409, 0.03125
    %v411 = vadd.f32 %v410, 1e-05
    %v412 = vrsqrt.pop %v411
    %v413 = vmul.f32 %v405, %v412
    %v414 = vmul.f32 %v413, %v399
    %v415 = vadd.f32 %v414, %v400
    %v416 = vld [vmem:[#allocation4 + $0xc0] ss:$0 sm:$0xff]
    %v417 = vld [vmem:[#allocation4 + $0xd8] ss:$0 sm:$0xff]
    %v418 = vmul.f32 %v274, %v68
    %419 = vadd.xlane.f32.xlu0 %v418
    %v420 = vpop.xlane.xlu0 %419
    %v421 = vmul.f32 %v420, 0.03125
    %v422 = vsub.f32 %v274, %v421
    %v423 = vmul.f32 %v422, %v68
    %v424 = vmul.f32 %v423, %v423
    %425 = vadd.xlane.f32.xlu0 %v424
    %v426 = vpop.xlane.xlu0 %425
    %v427 = vmul.f32 %v426, 0.03125
    %v428 = vadd.f32 %v427, 1e-05
    %v429 = vrsqrt.pop %v428
    %v430 = vmul.f32 %v422, %v429
    %v431 = vmul.f32 %v430, %v416
    %v432 = vadd.f32 %v431, %v417
    %v433 = vld [vmem:[#allocation2 + $0x180] sm:$0xf]
    %v434 = vld [vmem:[#allocation2 + $0x18c] sm:$0xf]
    %v435 = vld [vmem:[#allocation2 + $0x198] sm:$0xf]
    %v436 = vld [vmem:[#allocation2 + $0x1a4] sm:$0xf]
    %v437 = vld [vmem:[#allocation2 + $0x1b0] sm:$0xf]
    %v438 = vld [vmem:[#allocation2 + $0x1bc] sm:$0xf]
    %v439 = vld [vmem:[#allocation2 + $0x1c8] sm:$0xf]
    %v440 = vld [vmem:[#allocation2 + $0x1d4] sm:$0xf]
    %v441 = vld [vmem:[#allocation2 + $0x1e0] sm:$0xf]
    %v442 = vld [vmem:[#allocation2 + $0x1ec] sm:$0xf]
    %v443 = vld [vmem:[#allocation2 + $0x1f8] sm:$0xf]
    %v444 = vld [vmem:[#allocation2 + $0x204] sm:$0xf]
    %v445 = vld [vmem:[#allocation2 + $0x210] sm:$0xf]
    %v446 = vld [vmem:[#allocation2 + $0x21c] sm:$0xf]
    %v447 = vld [vmem:[#allocation2 + $0x228] sm:$0xf]
    %v448 = vld [vmem:[#allocation2 + $0x234] sm:$0xf]
    %v449 = vpack.c.bf16 %v432, %v432
    %v450 = vld [vmem:[#allocation4 + $0xf0] ss:$0 sm:$0xff]
    %v467 = vunpack.c.l.b16 %v433
    %v468 = vunpack.c.l.b16 %v434
    %v469 = vunpack.c.l.b16 %v435
    %v470 = vunpack.c.l.b16 %v436
    %v471 = vunpack.c.l.b16 %v437
    %v472 = vunpack.c.l.b16 %v438
    %v473 = vunpack.c.l.b16 %v439
    %v474 = vunpack.c.l.b16 %v440
    %v475 = vunpack.c.l.b16 %v441
    %v476 = vunpack.c.l.b16 %v442
    %v477 = vunpack.c.l.b16 %v443
    %v478 = vunpack.c.l.b16 %v444
    %v479 = vunpack.c.l.b16 %v445
    %v480 = vunpack.c.l.b16 %v446
    %v481 = vunpack.c.l.b16 %v447
    %v482 = vunpack.c.l.b16 %v448
    %v483 = vpack.c.b16 %v468, %v467
    %v484 = vpack.c.b16 %v470, %v469
    %v485 = vpack.c.b16 %v472, %v471
    %v486 = vpack.c.b16 %v474, %v473
    %v487 = vpack.c.b16 %v476, %v475
    %v488 = vpack.c.b16 %v478, %v477
    %v489 = vpack.c.b16 %v480, %v479
    %v490 = vpack.c.b16 %v482, %v481
    %499 = vmatprep.subr.bf16.mxu0 0
    %500 = vmatpush1.bf16.msra.mxu0 %v490
    %501 = vmatprep.subr.bf16.mxu0 0
    %502 = vmatpush1.bf16.msra.mxu0 %v489
    %503 = vmatprep.subr.bf16.mxu0 0
    %504 = vmatpush1.bf16.msra.mxu0 %v488
    %505 = vmatprep.subr.bf16.mxu0 0
    %506 = vmatpush1.bf16.msra.mxu0 %v487
    %507 = vmatprep.subr.bf16.mxu0 0
    %508 = vmatpush1.bf16.msra.mxu0 %v486
    %509 = vmatprep.subr.bf16.mxu0 0
    %510 = vmatpush1.bf16.msra.mxu0 %v485
    %511 = vmatprep.subr.bf16.mxu0 0
    %512 = vmatpush1.bf16.msra.mxu0 %v484
    %513 = vmatprep.subr.bf16.mxu0 0
    %514 = vmatpush1.bf16.msra.mxu0 %v483
    %515 = vmatprep.subr.bf16.mxu0 0
    %516 = vmatpush2.bf16.msra.mxu0 0
    %517 = vmatprep.subr.bf16.mxu0 0
    %518 = vmatpush2.bf16.msra.mxu0 0
    %519 = vmatprep.subr.bf16.mxu0 0
    %520 = vmatpush2.bf16.msra.mxu0 0
    %521 = vmatprep.subr.bf16.mxu0 0
    %522 = vmatpush2.bf16.msra.mxu0 0
    %523 = vmatprep.subr.bf16.mxu0 0
    %524 = vmatpush2.bf16.msra.mxu0 0
    %525 = vmatprep.subr.bf16.mxu0 0
    %526 = vmatpush2.bf16.msra.mxu0 0
    %527 = vmatprep.subr.bf16.mxu0 0
    %528 = vmatpush2.bf16.msra.mxu0 0
    %529 = vmatprep.subr.bf16.mxu0 0
    %530 = vmatpush2.bf16.msra.mxu0 0
    %531 = vmatprep.mubr.bf16.mxu0 0
    %532 = vmatmul.mubr.bf16.gmra.mxu0 %v449
    %v533 = vpop.f32.mrf.mxu0
    %v534 = vadd.f32 %v450, %v533
    %v535 = vpop.f32.mrf.mxu0
    %v536 = vpop.f32.mrf.mxu0
    %v537 = vpop.f32.mrf.mxu0
    %538 = vdwg.mxu0
    %v539 = vmax.f32 %v534, 0.0
    %v540 = vld [vmem:[#allocation4 + $0x108] ss:$0 sm:$0xff]
    %v541 = vld [vmem:[#allocation4 + $0x120] ss:$0 sm:$0xff]
    %v542 = vmul.f32 %v539, %v68
    %543 = vadd.xlane.f32.xlu0 %v542
    %v544 = vpop.xlane.xlu0 %543
    %v545 = vmul.f32 %v544, 0.03125
    %v546 = vsub.f32 %v539, %v545
    %v547 = vmul.f32 %v546, %v68
    %v548 = vmul.f32 %v547, %v547
    %549 = vadd.xlane.f32.xlu0 %v548
    %v550 = vpop.xlane.xlu0 %549
    %v551 = vmul.f32 %v550, 0.03125
    %v552 = vadd.f32 %v551, 1e-05
    %v553 = vrsqrt.pop %v552
    %v554 = vmul.f32 %v546, %v553
    %v555 = vmul.f32 %v554, %v540
    %v556 = vadd.f32 %v555, %v541
    %v557 = vld [vmem:[%s1] sm:$0xff]
    %559 = vset.pattern.permute.xlu0 0
    %560 = vperm.xlu0 %559, %v52
    %v561 = vpop.permute.xlu0 %560
    %v563 = vmul.f32 %v557, %v561
    %v564 = vld [vmem:[#allocation2 + $0x240] sm:$0xff]
    %v565 = vld [vmem:[#allocation2 + $0x248] sm:$0xf]
    %v566 = vld [vmem:[#allocation2 + $0x24c] sm:$0xff]
    %v567 = vld [vmem:[#allocation2 + $0x254] sm:$0xf]
    %v568 = vld [vmem:[#allocation2 + $0x258] sm:$0xff]
    %v569 = vld [vmem:[#allocation2 + $0x260] sm:$0xf]
    %v570 = vld [vmem:[#allocation2 + $0x264] sm:$0xff]
    %v571 = vld [vmem:[#allocation2 + $0x26c] sm:$0xf]
    %v572 = vld [vmem:[#allocation2 + $0x270] sm:$0xff]
    %v573 = vld [vmem:[#allocation2 + $0x278] sm:$0xf]
    %v574 = vld [vmem:[#allocation2 + $0x27c] sm:$0xff]
    %v575 = vld [vmem:[#allocation2 + $0x284] sm:$0xf]
    %v576 = vld [vmem:[#allocation2 + $0x288] sm:$0xff]
    %v577 = vld [vmem:[#allocation2 + $0x290] sm:$0xf]
    %v578 = vld [vmem:[#allocation2 + $0x294] sm:$0xff]
    %v579 = vld [vmem:[#allocation2 + $0x29c] sm:$0xf]
    %v580 = vld [vmem:[#allocation2 + $0x2a0] sm:$0xff]
    %v581 = vld [vmem:[#allocation2 + $0x2a8] sm:$0xf]
    %v582 = vld [vmem:[#allocation2 + $0x2ac] sm:$0xff]
    %v583 = vld [vmem:[#allocation2 + $0x2b4] sm:$0xf]
    %v584 = vld [vmem:[#allocation2 + $0x2b8] sm:$0xff]
    %v585 = vld [vmem:[#allocation2 + $0x2c0] sm:$0xf]
    %v586 = vld [vmem:[#allocation2 + $0x2c4] sm:$0xff]
    %v587 = vld [vmem:[#allocation2 + $0x2cc] sm:$0xf]
    %v588 = vld [vmem:[#allocation2 + $0x2d0] sm:$0xff]
    %v589 = vld [vmem:[#allocation2 + $0x2d8] sm:$0xf]
    %v590 = vld [vmem:[#allocation2 + $0x2dc] sm:$0xff]
    %v591 = vld [vmem:[#allocation2 + $0x2e4] sm:$0xf]
    %v592 = vld [vmem:[#allocation2 + $0x2e8] sm:$0xff]
    %v593 = vld [vmem:[#allocation2 + $0x2f0] sm:$0xf]
    %v594 = vld [vmem:[#allocation2 + $0x2f4] sm:$0xff]
    %v595 = vld [vmem:[#allocation2 + $0x2fc] sm:$0xf]
    %v596 = vpack.c.bf16 %v415, %v415
    %s597 = scalar_lea.vmem [#allocation4], 312
    %v598 = vld [vmem:[%s597] ss:$8 sm:$0x7]
    %v600 = vlaneseq
    %v601 = vshrl.u32 %v600, 7
    %v602 = vsub.s32 0, %v601
    %v603 = vrot.slane %v598, %v602
    %v604 = vlaneseq
    %v605 = vshrl.u32 %v604, 7
    %v606 = vsub.s32 1, %v605
    %v607 = vrot.slane %v598, %v606
    %v608 = vlaneseq
    %v609 = vshrl.u32 %v608, 7
    %v610 = vsub.s32 2, %v609
    %v611 = vrot.slane %v598, %v610
    %v647 = vunpack.c.l.b16 %v564
    %v648 = vunpack.c.h.b16 %v564
    %v649 = vunpack.c.l.b16 %v565
    %v650 = vunpack.c.l.b16 %v566
    %v651 = vunpack.c.h.b16 %v566
    %v652 = vunpack.c.l.b16 %v567
    %v653 = vunpack.c.l.b16 %v568
    %v654 = vunpack.c.h.b16 %v568
    %v655 = vunpack.c.l.b16 %v569
    %v656 = vunpack.c.l.b16 %v570
    %v657 = vunpack.c.h.b16 %v570
    %v658 = vunpack.c.l.b16 %v571
    %v659 = vunpack.c.l.b16 %v572
    %v660 = vunpack.c.h.b16 %v572
    %v661 = vunpack.c.l.b16 %v573
    %v662 = vunpack.c.l.b16 %v574
    %v663 = vunpack.c.h.b16 %v574
    %v664 = vunpack.c.l.b16 %v575
    %v665 = vunpack.c.l.b16 %v576
    %v666 = vunpack.c.h.b16 %v576
    %v667 = vunpack.c.l.b16 %v577
    %v668 = vunpack.c.l.b16 %v578
    %v669 = vunpack.c.h.b16 %v578
    %v670 = vunpack.c.l.b16 %v579
    %v671 = vunpack.c.l.b16 %v580
    %v672 = vunpack.c.h.b16 %v580
    %v673 = vunpack.c.l.b16 %v581
    %v674 = vunpack.c.l.b16 %v582
    %v675 = vunpack.c.h.b16 %v582
    %v676 = vunpack.c.l.b16 %v583
    %v677 = vunpack.c.l.b16 %v584
    %v678 = vunpack.c.h.b16 %v584
    %v679 = vunpack.c.l.b16 %v585
    %v680 = vunpack.c.l.b16 %v586
    %v681 = vunpack.c.h.b16 %v586
    %v682 = vunpack.c.l.b16 %v587
    %v683 = vunpack.c.l.b16 %v588
    %v684 = vunpack.c.h.b16 %v588
    %v685 = vunpack.c.l.b16 %v589
    %v686 = vunpack.c.l.b16 %v590
    %v687 = vunpack.c.h.b16 %v590
    %v688 = vunpack.c.l.b16 %v591
    %v689 = vunpack.c.l.b16 %v592
    %v690 = vunpack.c.h.b16 %v592
    %v691 = vunpack.c.l.b16 %v593
    %v692 = vunpack.c.l.b16 %v594
    %v693 = vunpack.c.h.b16 %v594
    %v694 = vunpack.c.l.b16 %v595
    %v695 = vpack.c.b16 %v650, %v647
    %v696 = vpack.c.b16 %v651, %v648
    %v697 = vpack.c.b16 %v652, %v649
    %v698 = vpack.c.b16 %v656, %v653
    %v699 = vpack.c.b16 %v657, %v654
    %v700 = vpack.c.b16 %v658, %v655
    %v701 = vpack.c.b16 %v662, %v659
    %v702 = vpack.c.b16 %v663, %v660
    %v703 = vpack.c.b16 %v664, %v661
    %v704 = vpack.c.b16 %v668, %v665
    %v705 = vpack.c.b16 %v669, %v666
    %v706 = vpack.c.b16 %v670, %v667
    %v707 = vpack.c.b16 %v674, %v671
    %v708 = vpack.c.b16 %v675, %v672
    %v709 = vpack.c.b16 %v676, %v673
    %v710 = vpack.c.b16 %v680, %v677
    %v711 = vpack.c.b16 %v681, %v678
    %v712 = vpack.c.b16 %v682, %v679
    %v713 = vpack.c.b16 %v686, %v683
    %v714 = vpack.c.b16 %v687, %v684
    %v715 = vpack.c.b16 %v688, %v685
    %v716 = vpack.c.b16 %v692, %v689
    %v717 = vpack.c.b16 %v693, %v690
    %v718 = vpack.c.b16 %v694, %v691
    %743 = vmatprep.subr.bf16.mxu0 %v717
    %744 = vmatpush1.bf16.msra.mxu0 %v716
    %745 = vmatprep.subr.bf16.mxu0 %v714
    %746 = vmatpush1.bf16.msra.mxu0 %v713
    %747 = vmatprep.subr.bf16.mxu0 %v711
    %748 = vmatpush1.bf16.msra.mxu0 %v710
    %749 = vmatprep.subr.bf16.mxu0 %v708
    %750 = vmatpush1.bf16.msra.mxu0 %v707
    %751 = vmatprep.subr.bf16.mxu0 %v705
    %752 = vmatpush1.bf16.msra.mxu0 %v704
    %753 = vmatprep.subr.bf16.mxu0 %v702
    %754 = vmatpush1.bf16.msra.mxu0 %v701
    %755 = vmatprep.subr.bf16.mxu0 %v699
    %756 = vmatpush1.bf16.msra.mxu0 %v698
    %757 = vmatprep.subr.bf16.mxu0 %v696
    %758 = vmatpush1.bf16.msra.mxu0 %v695
    %759 = vmatprep.subr.bf16.mxu0 0
    %760 = vmatpush2.bf16.msra.mxu0 0
    %761 = vmatprep.subr.bf16.mxu0 0
    %762 = vmatpush2.bf16.msra.mxu0 0
    %763 = vmatprep.subr.bf16.mxu0 0
    %764 = vmatpush2.bf16.msra.mxu0 0
    %765 = vmatprep.subr.bf16.mxu0 0
    %766 = vmatpush2.bf16.msra.mxu0 0
    %767 = vmatprep.subr.bf16.mxu0 0
    %768 = vmatpush2.bf16.msra.mxu0 0
    %769 = vmatprep.subr.bf16.mxu0 0
    %770 = vmatpush2.bf16.msra.mxu0 0
    %771 = vmatprep.subr.bf16.mxu0 0
    %772 = vmatpush2.bf16.msra.mxu0 0
    %773 = vmatprep.subr.bf16.mxu0 0
    %774 = vmatpush2.bf16.msra.mxu0 0
    %775 = vmatprep.mubr.bf16.mxu0 0
    %776 = vmatmul.mubr.bf16.gmra.mxu0 %v596
    %v777 = vpop.f32.mrf.mxu0
    %v778 = vadd.f32 %v603, %v777
    %v779 = vpop.f32.mrf.mxu0
    %v780 = vadd.f32 %v607, %v779
    %v781 = vpop.f32.mrf.mxu0
    %v782 = vpop.f32.mrf.mxu0
    %783 = vdwg.mxu0
    %784 = vmatprep.subr.bf16.mxu0 0
    %785 = vmatpush1.bf16.msra.mxu0 %v718
    %786 = vmatprep.subr.bf16.mxu0 0
    %787 = vmatpush1.bf16.msra.mxu0 %v715
    %788 = vmatprep.subr.bf16.mxu0 0
    %789 = vmatpush1.bf16.msra.mxu0 %v712
    %790 = vmatprep.subr.bf16.mxu0 0
    %791 = vmatpush1.bf16.msra.mxu0 %v709
    %792 = vmatprep.subr.bf16.mxu0 0
    %793 = vmatpush1.bf16.msra.mxu0 %v706
    %794 = vmatprep.subr.bf16.mxu0 0
    %795 = vmatpush1.bf16.msra.mxu0 %v703
    %796 = vmatprep.subr.bf16.mxu0 0
    %797 = vmatpush1.bf16.msra.mxu0 %v700
    %798 = vmatprep.subr.bf16.mxu0 0
    %799 = vmatpush1.bf16.msra.mxu0 %v697
    %800 = vmatprep.subr.bf16.mxu0 0
    %801 = vmatpush2.bf16.msra.mxu0 0
    %802 = vmatprep.subr.bf16.mxu0 0
    %803 = vmatpush2.bf16.msra.mxu0 0
    %804 = vmatprep.subr.bf16.mxu0 0
    %805 = vmatpush2.bf16.msra.mxu0 0
    %806 = vmatprep.subr.bf16.mxu0 0
    %807 = vmatpush2.bf16.msra.mxu0 0
    %808 = vmatprep.subr.bf16.mxu0 0
    %809 = vmatpush2.bf16.msra.mxu0 0
    %810 = vmatprep.subr.bf16.mxu0 0
    %811 = vmatpush2.bf16.msra.mxu0 0
    %812 = vmatprep.subr.bf16.mxu0 0
    %813 = vmatpush2.bf16.msra.mxu0 0
    %814 = vmatprep.subr.bf16.mxu0 0
    %815 = vmatpush2.bf16.msra.mxu0 0
    %816 = vmatprep.mubr.bf16.mxu0 0
    %817 = vmatmul.mubr.bf16.gmra.mxu0 %v596
    %v818 = vpop.f32.mrf.mxu0
    %v819 = vadd.f32 %v611, %v818
    %v820 = vpop.f32.mrf.mxu0
    %v821 = vpop.f32.mrf.mxu0
    %v822 = vpop.f32.mrf.mxu0
    %823 = vdwg.mxu0
    %v824 = vld [vmem:[#allocation2 + $0x300] sm:$0xff]
    %v825 = vld [vmem:[#allocation2 + $0x308] sm:$0xf]
    %v826 = vld [vmem:[#allocation2 + $0x30c] sm:$0xff]
    %v827 = vld [vmem:[#allocation2 + $0x314] sm:$0xf]
    %v828 = vld [vmem:[#allocation2 + $0x318] sm:$0xff]
    %v829 = vld [vmem:[#allocation2 + $0x320] sm:$0xf]
    %v830 = vld [vmem:[#allocation2 + $0x324] sm:$0xff]
    %v831 = vld [vmem:[#allocation2 + $0x32c] sm:$0xf]
    %v832 = vld [vmem:[#allocation2 + $0x330] sm:$0xff]
    %v833 = vld [vmem:[#allocation2 + $0x338] sm:$0xf]
    %v834 = vld [vmem:[#allocation2 + $0x33c] sm:$0xff]
    %v835 = vld [vmem:[#allocation2 + $0x344] sm:$0xf]
    %v836 = vld [vmem:[#allocation2 + $0x348] sm:$0xff]
    %v837 = vld [vmem:[#allocation2 + $0x350] sm:$0xf]
    %v838 = vld [vmem:[#allocation2 + $0x354] sm:$0xff]
    %v839 = vld [vmem:[#allocation2 + $0x35c] sm:$0xf]
    %v840 = vld [vmem:[#allocation2 + $0x360] sm:$0xff]
    %v841 = vld [vmem:[#allocation2 + $0x368] sm:$0xf]
    %v842 = vld [vmem:[#allocation2 + $0x36c] sm:$0xff]
    %v843 = vld [vmem:[#allocation2 + $0x374] sm:$0xf]
    %v844 = vld [vmem:[#allocation2 + $0x378] sm:$0xff]
    %v845 = vld [vmem:[#allocation2 + $0x380] sm:$0xf]
    %v846 = vld [vmem:[#allocation2 + $0x384] sm:$0xff]
    %v847 = vld [vmem:[#allocation2 + $0x38c] sm:$0xf]
    %v848 = vld [vmem:[#allocation2 + $0x390] sm:$0xff]
    %v849 = vld [vmem:[#allocation2 + $0x398] sm:$0xf]
    %v850 = vld [vmem:[#allocation2 + $0x39c] sm:$0xff]
    %v851 = vld [vmem:[#allocation2 + $0x3a4] sm:$0xf]
    %v852 = vld [vmem:[#allocation2 + $0x3a8] sm:$0xff]
    %v853 = vld [vmem:[#allocation2 + $0x3b0] sm:$0xf]
    %v854 = vld [vmem:[#allocation2 + $0x3b4] sm:$0xff]
    %v855 = vld [vmem:[#allocation2 + $0x3bc] sm:$0xf]
    %v856 = vpack.c.bf16 %v563, %v563
    %s857 = scalar_lea.vmem [#allocation4], 336
    %v858 = vld [vmem:[%s857] ss:$8 sm:$0x7]
    %v860 = vlaneseq
    %v861 = vshrl.u32 %v860, 7
    %v862 = vsub.s32 0, %v861
    %v863 = vrot.slane %v858, %v862
    %v864 = vlaneseq
    %v865 = vshrl.u32 %v864, 7
    %v866 = vsub.s32 1, %v865
    %v867 = vrot.slane %v858, %v866
    %v868 = vlaneseq
    %v869 = vshrl.u32 %v868, 7
    %v870 = vsub.s32 2, %v869
    %v871 = vrot.slane %v858, %v870
    %v907 = vunpack.c.l.b16 %v824
    %v908 = vunpack.c.h.b16 %v824
    %v909 = vunpack.c.l.b16 %v825
    %v910 = vunpack.c.l.b16 %v826
    %v911 = vunpack.c.h.b16 %v826
    %v912 = vunpack.c.l.b16 %v827
    %v913 = vunpack.c.l.b16 %v828
    %v914 = vunpack.c.h.b16 %v828
    %v915 = vunpack.c.l.b16 %v829
    %v916 = vunpack.c.l.b16 %v830
    %v917 = vunpack.c.h.b16 %v830
    %v918 = vunpack.c.l.b16 %v831
    %v919 = vunpack.c.l.b16 %v832
    %v920 = vunpack.c.h.b16 %v832
    %v921 = vunpack.c.l.b16 %v833
    %v922 = vunpack.c.l.b16 %v834
    %v923 = vunpack.c.h.b16 %v834
    %v924 = vunpack.c.l.b16 %v835
    %v925 = vunpack.c.l.b16 %v836
    %v926 = vunpack.c.h.b16 %v836
    %v927 = vunpack.c.l.b16 %v837
    %v928 = vunpack.c.l.b16 %v838
    %v929 = vunpack.c.h.b16 %v838
    %v930 = vunpack.c.l.b16 %v839
    %v931 = vunpack.c.l.b16 %v840
    %v932 = vunpack.c.h.b16 %v840
    %v933 = vunpack.c.l.b16 %v841
    %v934 = vunpack.c.l.b16 %v842
    %v935 = vunpack.c.h.b16 %v842
    %v936 = vunpack.c.l.b16 %v843
    %v937 = vunpack.c.l.b16 %v844
    %v938 = vunpack.c.h.b16 %v844
    %v939 = vunpack.c.l.b16 %v845
    %v940 = vunpack.c.l.b16 %v846
    %v941 = vunpack.c.h.b16 %v846
    %v942 = vunpack.c.l.b16 %v847
    %v943 = vunpack.c.l.b16 %v848
    %v944 = vunpack.c.h.b16 %v848
    %v945 = vunpack.c.l.b16 %v849
    %v946 = vunpack.c.l.b16 %v850
    %v947 = vunpack.c.h.b16 %v850
    %v948 = vunpack.c.l.b16 %v851
    %v949 = vunpack.c.l.b16 %v852
    %v950 = vunpack.c.h.b16 %v852
    %v951 = vunpack.c.l.b16 %v853
    %v952 = vunpack.c.l.b16 %v854
    %v953 = vunpack.c.h.b16 %v854
    %v954 = vunpack.c.l.b16 %v855
    %v955 = vpack.c.b16 %v910, %v907
    %v956 = vpack.c.b16 %v911, %v908
    %v957 = vpack.c.b16 %v912, %v909
    %v958 = vpack.c.b16 %v916, %v913
    %v959 = vpack.c.b16 %v917, %v914
    %v960 = vpack.c.b16 %v918, %v915
    %v961 = vpack.c.b16 %v922, %v919
    %v962 = vpack.c.b16 %v923, %v920
    %v963 = vpack.c.b16 %v924, %v921
    %v964 = vpack.c.b16 %v928, %v925
    %v965 = vpack.c.b16 %v929, %v926
    %v966 = vpack.c.b16 %v930, %v927
    %v967 = vpack.c.b16 %v934, %v931
    %v968 = vpack.c.b16 %v935, %v932
    %v969 = vpack.c.b16 %v936, %v933
    %v970 = vpack.c.b16 %v940, %v937
    %v971 = vpack.c.b16 %v941, %v938
    %v972 = vpack.c.b16 %v942, %v939
    %v973 = vpack.c.b16 %v946, %v943
    %v974 = vpack.c.b16 %v947, %v944
    %v975 = vpack.c.b16 %v948, %v945
    %v976 = vpack.c.b16 %v952, %v949
    %v977 = vpack.c.b16 %v953, %v950
    %v978 = vpack.c.b16 %v954, %v951
    %1003 = vmatprep.subr.bf16.mxu0 %v977
    %1004 = vmatpush1.bf16.msra.mxu0 %v976
    %1005 = vmatprep.subr.bf16.mxu0 %v974
    %1006 = vmatpush1.bf16.msra.mxu0 %v973
    %1007 = vmatprep.subr.bf16.mxu0 %v971
    %1008 = vmatpush1.bf16.msra.mxu0 %v970
    %1009 = vmatprep.subr.bf16.mxu0 %v968
    %1010 = vmatpush1.bf16.msra.mxu0 %v967
    %1011 = vmatprep.subr.bf16.mxu0 %v965
    %1012 = vmatpush1.bf16.msra.mxu0 %v964
    %1013 = vmatprep.subr.bf16.mxu0 %v962
    %1014 = vmatpush1.bf16.msra.mxu0 %v961
    %1015 = vmatprep.subr.bf16.mxu0 %v959
    %1016 = vmatpush1.bf16.msra.mxu0 %v958
    %1017 = vmatprep.subr.bf16.mxu0 %v956
    %1018 = vmatpush1.bf16.msra.mxu0 %v955
    %1019 = vmatprep.subr.bf16.mxu0 0
    %1020 = vmatpush2.bf16.msra.mxu0 0
    %1021 = vmatprep.subr.bf16.mxu0 0
    %1022 = vmatpush2.bf16.msra.mxu0 0
    %1023 = vmatprep.subr.bf16.mxu0 0
    %1024 = vmatpush2.bf16.msra.mxu0 0
    %1025 = vmatprep.subr.bf16.mxu0 0
    %1026 = vmatpush2.bf16.msra.mxu0 0
    %1027 = vmatprep.subr.bf16.mxu0 0
    %1028 = vmatpush2.bf16.msra.mxu0 0
    %1029 = vmatprep.subr.bf16.mxu0 0
    %1030 = vmatpush2.bf16.msra.mxu0 0
    %1031 = vmatprep.subr.bf16.mxu0 0
    %1032 = vmatpush2.bf16.msra.mxu0 0
    %1033 = vmatprep.subr.bf16.mxu0 0
    %1034 = vmatpush2.bf16.msra.mxu0 0
    %1035 = vmatprep.mubr.bf16.mxu0 0
    %1036 = vmatmul.mubr.bf16.gmra.mxu0 %v856
    %v1037 = vpop.f32.mrf.mxu0
    %v1038 = vadd.f32 %v863, %v1037
    %v1039 = vpop.f32.mrf.mxu0
    %v1040 = vadd.f32 %v867, %v1039
    %v1041 = vpop.f32.mrf.mxu0
    %v1042 = vpop.f32.mrf.mxu0
    %1043 = vdwg.mxu0
    %1044 = vmatprep.subr.bf16.mxu0 0
    %1045 = vmatpush1.bf16.msra.mxu0 %v978
    %1046 = vmatprep.subr.bf16.mxu0 0
    %1047 = vmatpush1.bf16.msra.mxu0 %v975
    %1048 = vmatprep.subr.bf16.mxu0 0
    %1049 = vmatpush1.bf16.msra.mxu0 %v972
    %1050 = vmatprep.subr.bf16.mxu0 0
    %1051 = vmatpush1.bf16.msra.mxu0 %v969
    %1052 = vmatprep.subr.bf16.mxu0 0
    %1053 = vmatpush1.bf16.msra.mxu0 %v966
    %1054 = vmatprep.subr.bf16.mxu0 0
    %1055 = vmatpush1.bf16.msra.mxu0 %v963
    %1056 = vmatprep.subr.bf16.mxu0 0
    %1057 = vmatpush1.bf16.msra.mxu0 %v960
    %1058 = vmatprep.subr.bf16.mxu0 0
    %1059 = vmatpush1.bf16.msra.mxu0 %v957
    %1060 = vmatprep.subr.bf16.mxu0 0
    %1061 = vmatpush2.bf16.msra.mxu0 0
    %1062 = vmatprep.subr.bf16.mxu0 0
    %1063 = vmatpush2.bf16.msra.mxu0 0
    %1064 = vmatprep.subr.bf16.mxu0 0
    %1065 = vmatpush2.bf16.msra.mxu0 0
    %1066 = vmatprep.subr.bf16.mxu0 0
    %1067 = vmatpush2.bf16.msra.mxu0 0
    %1068 = vmatprep.subr.bf16.mxu0 0
    %1069 = vmatpush2.bf16.msra.mxu0 0
    %1070 = vmatprep.subr.bf16.mxu0 0
    %1071 = vmatpush2.bf16.msra.mxu0 0
    %1072 = vmatprep.subr.bf16.mxu0 0
    %1073 = vmatpush2.bf16.msra.mxu0 0
    %1074 = vmatprep.subr.bf16.mxu0 0
    %1075 = vmatpush2.bf16.msra.mxu0 0
    %1076 = vmatprep.mubr.bf16.mxu0 0
    %1077 = vmatmul.mubr.bf16.gmra.mxu0 %v856
    %v1078 = vpop.f32.mrf.mxu0
    %v1079 = vadd.f32 %v871, %v1078
    %v1080 = vpop.f32.mrf.mxu0
    %v1081 = vpop.f32.mrf.mxu0
    %v1082 = vpop.f32.mrf.mxu0
    %1083 = vdwg.mxu0
    %v1084 = vadd.f32 %v778, %v1038
    %v1085 = vxor.u32 %v1084, 2147483648
    %v1086 = vmul.f32 %v1085, 1.442695
    %v1087 = vpow.pop %v1086
    %v1088 = vadd.f32 %v1087, 1.0
    %v1089 = vrcp.pop %v1088
    %v1090 = vmul.f32 1.0, %v1089
    %v1091 = vadd.f32 %v780, %v1040
    %v1092 = vxor.u32 %v1091, 2147483648
    %v1093 = vmul.f32 %v1092, 1.442695
    %v1094 = vpow.pop %v1093
    %v1095 = vadd.f32 %v1094, 1.0
    %v1096 = vrcp.pop %v1095
    %v1097 = vmul.f32 1.0, %v1096
    %v1098 = vmul.f32 %v1090, %v1079
    %v1099 = vadd.f32 %v819, %v1098
    %v1100 = vtanh.pop %v1099
    %v1101 = vsub.f32 1.0, %v1097
    %v1102 = vmul.f32 %v1101, %v1100
    %v1103 = vmul.f32 %v1097, %v563
    %v1104 = vadd.f32 %v1102, %v1103
    %v1105 = vld [vmem:[#allocation4 + $0x168] ss:$0 sm:$0xff]
    %v1106 = vld [vmem:[#allocation4 + $0x180] ss:$0 sm:$0xff]
    %v1107 = vmul.f32 %v1104, %v68
    %1108 = vadd.xlane.f32.xlu0 %v1107
    %v1109 = vpop.xlane.xlu0 %1108
    %v1110 = vmul.f32 %v1109, 0.03125
    %v1111 = vsub.f32 %v1104, %v1110
    %v1112 = vmul.f32 %v1111, %v68
    %v1113 = vmul.f32 %v1112, %v1112
    %1114 = vadd.xlane.f32.xlu0 %v1113
    %v1115 = vpop.xlane.xlu0 %1114
    %v1116 = vmul.f32 %v1115, 0.03125
    %v1117 = vadd.f32 %v1116, 1e-05
    %v1118 = vrsqrt.pop %v1117
    %v1119 = vmul.f32 %v1111, %v1118
    %v1120 = vmul.f32 %v1119, %v1105
    %v1121 = vadd.f32 %v1120, %v1106
    %s1122 = scalar_lea.vmem [#allocation4], 408
    %v1123 = vld [vmem:[%s1122] ss:$8 sm:$0x3]
    %s1124 = scalar_lea.vmem [#allocation4], 432
    %v1125 = vld [vmem:[%s1124] ss:$8 sm:$0x3]
    %v1126 = vmul.f32 %v1121, %v85
    %v1127 = vmul.f32 %v556, %v86
    %v1128 = vadd.f32 %v1126, %v1127
    %1129 = vadd.xlane.f32.xlu0 %v1128
    %v1130 = vpop.xlane.xlu0 %1129
    %v1131 = vmul.f32 %v1130, 0.015625
    %v1132 = vsub.f32 %v1121, %v1131
    %v1133 = vsub.f32 %v556, %v1131
    %v1134 = vmul.f32 %v1132, %v85
    %v1135 = vmul.f32 %v1133, %v86
    %v1136 = vmul.f32 %v1134, %v1134
    %v1137 = vmul.f32 %v1135, %v1135
    %v1138 = vadd.f32 %v1136, %v1137
    %1139 = vadd.xlane.f32.xlu0 %v1138
    %v1140 = vpop.xlane.xlu0 %1139
    %v1141 = vmul.f32 %v1140, 0.015625
    %v1142 = vadd.f32 %v1141, 1e-05
    %v1143 = vrsqrt.pop %v1142
    %v1144 = vmul.f32 %v1132, %v1143
    %v1145 = vmul.f32 %v1133, %v1143
    %v1147 = vlaneseq
    %v1148 = vshrl.u32 %v1147, 7
    %v1149 = vsub.s32 0, %v1148
    %v1150 = vrot.slane %v1123, %v1149
    %v1151 = vlaneseq
    %v1152 = vshrl.u32 %v1151, 7
    %v1153 = vsub.s32 1, %v1152
    %v1154 = vrot.slane %v1123, %v1153
    %v1157 = vmul.f32 %v1144, %v1150
    %v1158 = vmul.f32 %v1145, %v1154
    %v1160 = vlaneseq
    %v1161 = vshrl.u32 %v1160, 7
    %v1162 = vsub.s32 0, %v1161
    %v1163 = vrot.slane %v1125, %v1162
    %v1164 = vlaneseq
    %v1165 = vshrl.u32 %v1164, 7
    %v1166 = vsub.s32 1, %v1165
    %v1167 = vrot.slane %v1125, %v1166
    %v1170 = vadd.f32 %v1157, %v1163
    %v1171 = vadd.f32 %v1158, %v1167
    %v1172 = vld [vmem:[#allocation2 + $0x3c0] sm:$0xf]
    %v1173 = vld [vmem:[#allocation2 + $0x3cc] sm:$0xf]
    %v1174 = vld [vmem:[#allocation2 + $0x3d8] sm:$0xf]
    %v1175 = vld [vmem:[#allocation2 + $0x3e4] sm:$0xf]
    %v1176 = vld [vmem:[#allocation2 + $0x3f0] sm:$0xf]
    %v1177 = vld [vmem:[#allocation2 + $0x3fc] sm:$0xf]
    %v1178 = vld [vmem:[#allocation2 + $0x408] sm:$0xf]
    %v1179 = vld [vmem:[#allocation2 + $0x414] sm:$0xf]
    %v1180 = vld [vmem:[#allocation2 + $0x420] sm:$0xf]
    %v1181 = vld [vmem:[#allocation2 + $0x42c] sm:$0xf]
    %v1182 = vld [vmem:[#allocation2 + $0x438] sm:$0xf]
    %v1183 = vld [vmem:[#allocation2 + $0x444] sm:$0xf]
    %v1184 = vld [vmem:[#allocation2 + $0x450] sm:$0xf]
    %v1185 = vld [vmem:[#allocation2 + $0x45c] sm:$0xf]
    %v1186 = vld [vmem:[#allocation2 + $0x468] sm:$0xf]
    %v1187 = vld [vmem:[#allocation2 + $0x474] sm:$0xf]
    %v1188 = vld [vmem:[#allocation2 + $0x480] sm:$0xf]
    %v1189 = vld [vmem:[#allocation2 + $0x48c] sm:$0xf]
    %v1190 = vld [vmem:[#allocation2 + $0x498] sm:$0xf]
    %v1191 = vld [vmem:[#allocation2 + $0x4a4] sm:$0xf]
    %v1192 = vld [vmem:[#allocation2 + $0x4b0] sm:$0xf]
    %v1193 = vld [vmem:[#allocation2 + $0x4bc] sm:$0xf]
    %v1194 = vld [vmem:[#allocation2 + $0x4c8] sm:$0xf]
    %v1195 = vld [vmem:[#allocation2 + $0x4d4] sm:$0xf]
    %v1196 = vld [vmem:[#allocation2 + $0x4e0] sm:$0xf]
    %v1197 = vld [vmem:[#allocation2 + $0x4ec] sm:$0xf]
    %v1198 = vld [vmem:[#allocation2 + $0x4f8] sm:$0xf]
    %v1199 = vld [vmem:[#allocation2 + $0x504] sm:$0xf]
    %v1200 = vld [vmem:[#allocation2 + $0x510] sm:$0xf]
    %v1201 = vld [vmem:[#allocation2 + $0x51c] sm:$0xf]
    %v1202 = vld [vmem:[#allocation2 + $0x528] sm:$0xf]
    %v1203 = vld [vmem:[#allocation2 + $0x534] sm:$0xf]
    %v1204 = vpack.c.bf16 %v1170, %v1170
    %v1205 = vpack.c.bf16 %v1171, %v1171
    %v1206 = vld [vmem:[#allocation4 + $0x1c8] ss:$0 sm:$0xff]
    %v1239 = vunpack.c.l.b16 %v1172
    %v1240 = vunpack.c.l.b16 %v1173
    %v1241 = vunpack.c.l.b16 %v1174
    %v1242 = vunpack.c.l.b16 %v1175
    %v1243 = vunpack.c.l.b16 %v1176
    %v1244 = vunpack.c.l.b16 %v1177
    %v1245 = vunpack.c.l.b16 %v1178
    %v1246 = vunpack.c.l.b16 %v1179
    %v1247 = vunpack.c.l.b16 %v1180
    %v1248 = vunpack.c.l.b16 %v1181
    %v1249 = vunpack.c.l.b16 %v1182
    %v1250 = vunpack.c.l.b16 %v1183
    %v1251 = vunpack.c.l.b16 %v1184
    %v1252 = vunpack.c.l.b16 %v1185
    %v1253 = vunpack.c.l.b16 %v1186
    %v1254 = vunpack.c.l.b16 %v1187
    %v1255 = vunpack.c.l.b16 %v1188
    %v1256 = vunpack.c.l.b16 %v1189
    %v1257 = vunpack.c.l.b16 %v1190
    %v1258 = vunpack.c.l.b16 %v1191
    %v1259 = vunpack.c.l.b16 %v1192
    %v1260 = vunpack.c.l.b16 %v1193
    %v1261 = vunpack.c.l.b16 %v1194
    %v1262 = vunpack.c.l.b16 %v1195
    %v1263 = vunpack.c.l.b16 %v1196
    %v1264 = vunpack.c.l.b16 %v1197
    %v1265 = vunpack.c.l.b16 %v1198
    %v1266 = vunpack.c.l.b16 %v1199
    %v1267 = vunpack.c.l.b16 %v1200
    %v1268 = vunpack.c.l.b16 %v1201
    %v1269 = vunpack.c.l.b16 %v1202
    %v1270 = vunpack.c.l.b16 %v1203
    %v1271 = vpack.c.b16 %v1240, %v1239
    %v1272 = vpack.c.b16 %v1242, %v1241
    %v1273 = vpack.c.b16 %v1244, %v1243
    %v1274 = vpack.c.b16 %v1246, %v1245
    %v1275 = vpack.c.b16 %v1248, %v1247
    %v1276 = vpack.c.b16 %v1250, %v1249
    %v1277 = vpack.c.b16 %v1252, %v1251
    %v1278 = vpack.c.b16 %v1254, %v1253
    %v1279 = vpack.c.b16 %v1256, %v1255
    %v1280 = vpack.c.b16 %v1258, %v1257
    %v1281 = vpack.c.b16 %v1260, %v1259
    %v1282 = vpack.c.b16 %v1262, %v1261
    %v1283 = vpack.c.b16 %v1264, %v1263
    %v1284 = vpack.c.b16 %v1266, %v1265
    %v1285 = vpack.c.b16 %v1268, %v1267
    %v1286 = vpack.c.b16 %v1270, %v1269
    %1303 = vmatprep.subr.bf16.mxu0 0
    %1304 = vmatpush1.bf16.msra.mxu0 %v1278
    %1305 = vmatprep.subr.bf16.mxu0 0
    %1306 = vmatpush1.bf16.msra.mxu0 %v1277
    %1307 = vmatprep.subr.bf16.mxu0 0
    %1308 = vmatpush1.bf16.msra.mxu0 %v1276
    %1309 = vmatprep.subr.bf16.mxu0 0
    %1310 = vmatpush1.bf16.msra.mxu0 %v1275
    %1311 = vmatprep.subr.bf16.mxu0 0
    %1312 = vmatpush1.bf16.msra.mxu0 %v1274
    %1313 = vmatprep.subr.bf16.mxu0 0
    %1314 = vmatpush1.bf16.msra.mxu0 %v1273
    %1315 = vmatprep.subr.bf16.mxu0 0
    %1316 = vmatpush1.bf16.msra.mxu0 %v1272
    %1317 = vmatprep.subr.bf16.mxu0 0
    %1318 = vmatpush1.bf16.msra.mxu0 %v1271
    %1319 = vmatprep.subr.bf16.mxu0 0
    %1320 = vmatpush2.bf16.msra.mxu0 %v1286
    %1321 = vmatprep.subr.bf16.mxu0 0
    %1322 = vmatpush2.bf16.msra.mxu0 %v1285
    %1323 = vmatprep.subr.bf16.mxu0 0
    %1324 = vmatpush2.bf16.msra.mxu0 %v1284
    %1325 = vmatprep.subr.bf16.mxu0 0
    %1326 = vmatpush2.bf16.msra.mxu0 %v1283
    %1327 = vmatprep.subr.bf16.mxu0 0
    %1328 = vmatpush2.bf16.msra.mxu0 %v1282
    %1329 = vmatprep.subr.bf16.mxu0 0
    %1330 = vmatpush2.bf16.msra.mxu0 %v1281
    %1331 = vmatprep.subr.bf16.mxu0 0
    %1332 = vmatpush2.bf16.msra.mxu0 %v1280
    %1333 = vmatprep.subr.bf16.mxu0 0
    %1334 = vmatpush2.bf16.msra.mxu0 %v1279
    %1335 = vmatprep.mubr.bf16.mxu0 %v1205
    %1336 = vmatmul.mubr.bf16.gmra.mxu0 %v1204
    %v1337 = vpop.f32.mrf.mxu0
    %v1338 = vadd.f32 %v1206, %v1337
    %v1339 = vpop.f32.mrf.mxu0
    %v1340 = vpop.f32.mrf.mxu0
    %v1341 = vpop.f32.mrf.mxu0
    %1342 = vdwg.mxu0
    %v1343 = vmax.f32 %v1338, 0.0
    %v1344 = vld [vmem:[#allocation4 + $0x1e0] ss:$0 sm:$0xff]
    %v1345 = vld [vmem:[#allocation4 + $0x1f8] ss:$0 sm:$0xff]
    %v1346 = vmul.f32 %v1343, %v68
    %1347 = vadd.xlane.f32.xlu0 %v1346
    %v1348 = vpop.xlane.xlu0 %1347
    %v1349 = vmul.f32 %v1348, 0.03125
    %v1350 = vsub.f32 %v1343, %v1349
    %v1351 = vmul.f32 %v1350, %v68
    %v1352 = vmul.f32 %v1351, %v1351
    %1353 = vadd.xlane.f32.xlu0 %v1352
    %v1354 = vpop.xlane.xlu0 %1353
    %v1355 = vmul.f32 %v1354, 0.03125
    %v1356 = vadd.f32 %v1355, 1e-05
    %v1357 = vrsqrt.pop %v1356
    %v1358 = vmul.f32 %v1350, %v1357
    %v1359 = vmul.f32 %v1358, %v1344
    %v1360 = vadd.f32 %v1359, %v1345
    %v1361 = vld [vmem:[#allocation2 + $0x540] sm:$0xf]
    %v1362 = vld [vmem:[#allocation2 + $0x54c] sm:$0xf]
    %v1363 = vld [vmem:[#allocation2 + $0x558] sm:$0xf]
    %v1364 = vld [vmem:[#allocation2 + $0x564] sm:$0xf]
    %v1365 = vld [vmem:[#allocation2 + $0x570] sm:$0xf]
    %v1366 = vld [vmem:[#allocation2 + $0x57c] sm:$0xf]
    %v1367 = vld [vmem:[#allocation2 + $0x588] sm:$0xf]
    %v1368 = vld [vmem:[#allocation2 + $0x594] sm:$0xf]
    %v1369 = vld [vmem:[#allocation2 + $0x5a0] sm:$0xf]
    %v1370 = vld [vmem:[#allocation2 + $0x5ac] sm:$0xf]
    %v1371 = vld [vmem:[#allocation2 + $0x5b8] sm:$0xf]
    %v1372 = vld [vmem:[#allocation2 + $0x5c4] sm:$0xf]
    %v1373 = vld [vmem:[#allocation2 + $0x5d0] sm:$0xf]
    %v1374 = vld [vmem:[#allocation2 + $0x5dc] sm:$0xf]
    %v1375 = vld [vmem:[#allocation2 + $0x5e8] sm:$0xf]
    %v1376 = vld [vmem:[#allocation2 + $0x5f4] sm:$0xf]
    %v1377 = vpack.c.bf16 %v1360, %v1360
    %v1378 = vld [vmem:[#allocation4 + $0x210] ss:$0 sm:$0xff]
    %v1395 = vunpack.c.l.b16 %v1361
    %v1396 = vunpack.c.l.b16 %v1362
    %v1397 = vunpack.c.l.b16 %v1363
    %v1398 = vunpack.c.l.b16 %v1364
    %v1399 = vunpack.c.l.b16 %v1365
    %v1400 = vunpack.c.l.b16 %v1366
    %v1401 = vunpack.c.l.b16 %v1367
    %v1402 = vunpack.c.l.b16 %v1368
    %v1403 = vunpack.c.l.b16 %v1369
    %v1404 = vunpack.c.l.b16 %v1370
    %v1405 = vunpack.c.l.b16 %v1371
    %v1406 = vunpack.c.l.b16 %v1372
    %v1407 = vunpack.c.l.b16 %v1373
    %v1408 = vunpack.c.l.b16 %v1374
    %v1409 = vunpack.c.l.b16 %v1375
    %v1410 = vunpack.c.l.b16 %v1376
    %v1411 = vpack.c.b16 %v1396, %v1395
    %v1412 = vpack.c.b16 %v1398, %v1397
    %v1413 = vpack.c.b16 %v1400, %v1399
    %v1414 = vpack.c.b16 %v1402, %v1401
    %v1415 = vpack.c.b16 %v1404, %v1403
    %v1416 = vpack.c.b16 %v1406, %v1405
    %v1417 = vpack.c.b16 %v1408, %v1407
    %v1418 = vpack.c.b16 %v1410, %v1409
    %1427 = vmatprep.subr.bf16.mxu0 0
    %1428 = vmatpush1.bf16.msra.mxu0 %v1418
    %1429 = vmatprep.subr.bf16.mxu0 0
    %1430 = vmatpush1.bf16.msra.mxu0 %v1417
    %1431 = vmatprep.subr.bf16.mxu0 0
    %1432 = vmatpush1.bf16.msra.mxu0 %v1416
    %1433 = vmatprep.subr.bf16.mxu0 0
    %1434 = vmatpush1.bf16.msra.mxu0 %v1415
    %1435 = vmatprep.subr.bf16.mxu0 0
    %1436 = vmatpush1.bf16.msra.mxu0 %v1414
    %1437 = vmatprep.subr.bf16.mxu0 0
    %1438 = vmatpush1.bf16.msra.mxu0 %v1413
    %1439 = vmatprep.subr.bf16.mxu0 0
    %1440 = vmatpush1.bf16.msra.mxu0 %v1412
    %1441 = vmatprep.subr.bf16.mxu0 0
    %1442 = vmatpush1.bf16.msra.mxu0 %v1411
    %1443 = vmatprep.subr.bf16.mxu0 0
    %1444 = vmatpush2.bf16.msra.mxu0 0
    %1445 = vmatprep.subr.bf16.mxu0 0
    %1446 = vmatpush2.bf16.msra.mxu0 0
    %1447 = vmatprep.subr.bf16.mxu0 0
    %1448 = vmatpush2.bf16.msra.mxu0 0
    %1449 = vmatprep.subr.bf16.mxu0 0
    %1450 = vmatpush2.bf16.msra.mxu0 0
    %1451 = vmatprep.subr.bf16.mxu0 0
    %1452 = vmatpush2.bf16.msra.mxu0 0
    %1453 = vmatprep.subr.bf16.mxu0 0
    %1454 = vmatpush2.bf16.msra.mxu0 0
    %1455 = vmatprep.subr.bf16.mxu0 0
    %1456 = vmatpush2.bf16.msra.mxu0 0
    %1457 = vmatprep.subr.bf16.mxu0 0
    %1458 = vmatpush2.bf16.msra.mxu0 0
    %1459 = vmatprep.mubr.bf16.mxu0 0
    %1460 = vmatmul.mubr.bf16.gmra.mxu0 %v1377
    %v1461 = vpop.f32.mrf.mxu0
    %v1462 = vadd.f32 %v1378, %v1461
    %v1463 = vpop.f32.mrf.mxu0
    %v1464 = vpop.f32.mrf.mxu0
    %v1465 = vpop.f32.mrf.mxu0
    %1466 = vdwg.mxu0
    %v1467 = vmax.f32 %v1462, 0.0
    %v1468 = vld [vmem:[#allocation4 + $0x228] ss:$0 sm:$0xff]
    %v1469 = vld [vmem:[#allocation4 + $0x240] ss:$0 sm:$0xff]
    %v1470 = vmul.f32 %v1467, %v68
    %1471 = vadd.xlane.f32.xlu0 %v1470
    %v1472 = vpop.xlane.xlu0 %1471
    %v1473 = vmul.f32 %v1472, 0.03125
    %v1474 = vsub.f32 %v1467, %v1473
    %v1475 = vmul.f32 %v1474, %v68
    %v1476 = vmul.f32 %v1475, %v1475
    %1477 = vadd.xlane.f32.xlu0 %v1476
    %v1478 = vpop.xlane.xlu0 %1477
    %v1479 = vmul.f32 %v1478, 0.03125
    %v1480 = vadd.f32 %v1479, 1e-05
    %v1481 = vrsqrt.pop %v1480
    %v1482 = vmul.f32 %v1474, %v1481
    %v1483 = vmul.f32 %v1482, %v1468
    %v1484 = vadd.f32 %v1483, %v1469
    %v1485 = vld [vmem:[#allocation2 + $0x600] sm:$0xf]
    %v1486 = vld [vmem:[#allocation2 + $0x60c] sm:$0xf]
    %v1487 = vld [vmem:[#allocation2 + $0x618] sm:$0xf]
    %v1488 = vld [vmem:[#allocation2 + $0x624] sm:$0xf]
    %v1489 = vld [vmem:[#allocation2 + $0x630] sm:$0xf]
    %v1490 = vld [vmem:[#allocation2 + $0x63c] sm:$0xf]
    %v1491 = vld [vmem:[#allocation2 + $0x648] sm:$0xf]
    %v1492 = vld [vmem:[#allocation2 + $0x654] sm:$0xf]
    %v1493 = vld [vmem:[#allocation2 + $0x660] sm:$0xf]
    %v1494 = vld [vmem:[#allocation2 + $0x66c] sm:$0xf]
    %v1495 = vld [vmem:[#allocation2 + $0x678] sm:$0xf]
    %v1496 = vld [vmem:[#allocation2 + $0x684] sm:$0xf]
    %v1497 = vld [vmem:[#allocation2 + $0x690] sm:$0xf]
    %v1498 = vld [vmem:[#allocation2 + $0x69c] sm:$0xf]
    %v1499 = vld [vmem:[#allocation2 + $0x6a8] sm:$0xf]
    %v1500 = vld [vmem:[#allocation2 + $0x6b4] sm:$0xf]
    %v1501 = vpack.c.bf16 %v1484, %v1484
    %v1502 = vld [vmem:[#allocation4 + $0x258] ss:$0 sm:$0xff]
    %v1519 = vunpack.c.l.b16 %v1485
    %v1520 = vunpack.c.l.b16 %v1486
    %v1521 = vunpack.c.l.b16 %v1487
    %v1522 = vunpack.c.l.b16 %v1488
    %v1523 = vunpack.c.l.b16 %v1489
    %v1524 = vunpack.c.l.b16 %v1490
    %v1525 = vunpack.c.l.b16 %v1491
    %v1526 = vunpack.c.l.b16 %v1492
    %v1527 = vunpack.c.l.b16 %v1493
    %v1528 = vunpack.c.l.b16 %v1494
    %v1529 = vunpack.c.l.b16 %v1495
    %v1530 = vunpack.c.l.b16 %v1496
    %v1531 = vunpack.c.l.b16 %v1497
    %v1532 = vunpack.c.l.b16 %v1498
    %v1533 = vunpack.c.l.b16 %v1499
    %v1534 = vunpack.c.l.b16 %v1500
    %v1535 = vpack.c.b16 %v1520, %v1519
    %v1536 = vpack.c.b16 %v1522, %v1521
    %v1537 = vpack.c.b16 %v1524, %v1523
    %v1538 = vpack.c.b16 %v1526, %v1525
    %v1539 = vpack.c.b16 %v1528, %v1527
    %v1540 = vpack.c.b16 %v1530, %v1529
    %v1541 = vpack.c.b16 %v1532, %v1531
    %v1542 = vpack.c.b16 %v1534, %v1533
    %1551 = vmatprep.subr.bf16.mxu0 0
    %1552 = vmatpush1.bf16.msra.mxu0 %v1542
    %1553 = vmatprep.subr.bf16.mxu0 0
    %1554 = vmatpush1.bf16.msra.mxu0 %v1541
    %1555 = vmatprep.subr.bf16.mxu0 0
    %1556 = vmatpush1.bf16.msra.mxu0 %v1540
    %1557 = vmatprep.subr.bf16.mxu0 0
    %1558 = vmatpush1.bf16.msra.mxu0 %v1539
    %1559 = vmatprep.subr.bf16.mxu0 0
    %1560 = vmatpush1.bf16.msra.mxu0 %v1538
    %1561 = vmatprep.subr.bf16.mxu0 0
    %1562 = vmatpush1.bf16.msra.mxu0 %v1537
    %1563 = vmatprep.subr.bf16.mxu0 0
    %1564 = vmatpush1.bf16.msra.mxu0 %v1536
    %1565 = vmatprep.subr.bf16.mxu0 0
    %1566 = vmatpush1.bf16.msra.mxu0 %v1535
    %1567 = vmatprep.subr.bf16.mxu0 0
    %1568 = vmatpush2.bf16.msra.mxu0 0
    %1569 = vmatprep.subr.bf16.mxu0 0
    %1570 = vmatpush2.bf16.msra.mxu0 0
    %1571 = vmatprep.subr.bf16.mxu0 0
    %1572 = vmatpush2.bf16.msra.mxu0 0
    %1573 = vmatprep.subr.bf16.mxu0 0
    %1574 = vmatpush2.bf16.msra.mxu0 0
    %1575 = vmatprep.subr.bf16.mxu0 0
    %1576 = vmatpush2.bf16.msra.mxu0 0
    %1577 = vmatprep.subr.bf16.mxu0 0
    %1578 = vmatpush2.bf16.msra.mxu0 0
    %1579 = vmatprep.subr.bf16.mxu0 0
    %1580 = vmatpush2.bf16.msra.mxu0 0
    %1581 = vmatprep.subr.bf16.mxu0 0
    %1582 = vmatpush2.bf16.msra.mxu0 0
    %1583 = vmatprep.mubr.bf16.mxu0 0
    %1584 = vmatmul.mubr.bf16.gmra.mxu0 %v1501
    %v1585 = vpop.f32.mrf.mxu0
    %v1586 = vadd.f32 %v1502, %v1585
    %v1587 = vpop.f32.mrf.mxu0
    %v1588 = vpop.f32.mrf.mxu0
    %v1589 = vpop.f32.mrf.mxu0
    %1590 = vdwg.mxu0
    %vm1591 = vcmp.lt.s32.totalorder %v54, 5
    %v1592 = vsel %vm1591, %v1586, -1e+30
    %1593 = vmax.xlane.f32.xlu0 %v1592
    %v1594 = vpop.xlane.xlu0 %1593
    %v1595 = vsub.f32 %v1592, %v1594
    %v1596 = vmul.f32 %v1595, 1.442695
    %v1597 = vpow.pop %v1596
    %1598 = vadd.xlane.f32.xlu0 %v1597
    %v1599 = vpop.xlane.xlu0 %1598
    %v1600 = vlog2.pop %v1599
    %v1601 = vmul.f32 %v1600, 0.6931472
    %v1602 = vadd.f32 %v1594, %v1601
    %v1603 = vsub.f32 %v1594, %v1602
    %vm1604 = vcmp.ge.f32.partialorder %v1592, %v1594
    %v1605 = vsel %vm1604, %v54, 128
    %v1606 = vand.u32 %v1605, 65535
    %v1607 = vshra.s32 %v1605, 16
    %v1608 = vcvt.s32.f32 %v1606
    %v1609 = vcvt.s32.f32 %v1607
    %1610 = vmin.xlane.f32.xlu0 %v1609
    %v1611 = vpop.xlane.xlu0 %1610
    %vm1612 = vcmp.eq.f32.partialorder %v1609, %v1611
    %v1613 = vsel %vm1612, %v1608, inf
    %1614 = vmin.xlane.f32.xlu0 %v1613
    %v1615 = vpop.xlane.xlu0 %1614
    %v1616 = vcvt.f32.s32 %v1615
    %v1617 = vcvt.f32.s32 %v1611
    %v1618 = vshll.u32 %v1617, 16
    %v1619 = vadd.s32 %v1618, %v1616
    %1620 = vst [vmem:[%s6] sm:$0xff] %v1104
    %vm1621 = vcmp.eq.s32.totalorder %v54, 0
    %v1622 = vcvt.s32.f32 %v1619
    %vm1623 = vcmp.eq.s32.totalorder %v54, 1
    %v1624 = vsel %vm1623, %v1603, 0.0
    %v1625 = vsel %vm1621, %v1622, %v1624
    %1626 = vst [vmem:[%s5] sm:$0xff] %v1625
    // Predicated region
    $region30: #{run.1} parent=1 // pred_check
      _
    $region31: #{run.1} parent=1 // pred_check_branch
      %1628 = sbr.rel (0) target = $region33
    $region32: #{run.1} parent=1 // pred_region
      _
    $region33: #{run.1} parent=1 // pred_fallthru
      _
    // Predicated region
    $region34: #{run.1} parent=1 // pred_check
      _
    $region35: #{run.1} parent=1 // pred_check_branch
      %1630 = sbr.rel (0) target = $region37
    $region36: #{run.1} parent=1 // pred_region
      _
    $region37: #{run.1} parent=1 // pred_fallthru
      _
    // Predicated region
    $region38: #{run.1} parent=1 // pred_check
      _
    $region39: #{run.1} parent=1 // pred_check_branch
      %1632 = sbr.rel (0) target = $region41
    $region40: #{run.1} parent=1 // pred_region
      _
    $region41: #{run.1} parent=1 // pred_fallthru
      _
    // Predicated region
    $region42: #{run.1} parent=1 // pred_check
      _
    $region43: #{run.1} parent=1 // pred_check_branch
      %1634 = sbr.rel (0) target = $region45
    $region44: #{run.1} parent=1 // pred_region
      _
    $region45: #{run.1} parent=1 // pred_fallthru
      _
    %1635 = vsyncpa [#allocation3], 1
    %1636 = vsyncpa [#allocation5], 1

</llo_original>
